<compile_context>
chip_gen: v7x
topology: tpu7x:2x2x1
jax: 0.10.0
libtpu: 0.0.40
codegen_flags: <defaults>
</compile_context>

<pallas_src>
import math
import jax
import jax.numpy as jnp
from jax import lax
from jax.experimental import pallas as pl
from jax.experimental.pallas import tpu as pltpu

EMB = 32       # k
HEADS = 4      # h
SEQ = 8        # t
BATCH = 2
FF_MULT = 4
FF_HIDDEN = FF_MULT * EMB
LN_EPS = 1e-5


def _layernorm(x, gamma, beta):
    mean = jnp.mean(x, axis=-1, keepdims=True)
    var = jnp.mean((x - mean) ** 2, axis=-1, keepdims=True)
    return (x - mean) * lax.rsqrt(var + LN_EPS) * gamma + beta


def transformer_block_kernel(
    x_ref,     # (B, T, K)
    wh_ref,    # (2H, K, K): [A_h = scale^2*wq_h@wk_h^T (H) | wvu_h = wv_h@wu_h (H)]
    w1_ref,    # (K, FF_HIDDEN)
    w2_ref,    # (FF_HIDDEN, K)
    vk_ref,    # (6, K): [bu, g1, b1, g2, b2, bb2]
    vff_ref,   # (1, FF_HIDDEN): [bb1]
    o_ref,     # (B, T, K)
):
    B, T, K = x_ref.shape
    H = HEADS
    R = B * T

    x3 = x_ref[...]                 # (B, T, K)
    x = x3.reshape(R, K)            # (B*T, K): tile-aligned leading-dim merge (T == 8)

    # ---- fused head-split projection (q/k folded into A, v folded with unifyheads) ----
    w = wh_ref[...]                                            # (2H, K, K)
    xb = jnp.broadcast_to(x[None, :, :], (2 * H, R, K))
    proj = lax.dot_general(
        xb, w, dimension_numbers=(((2,), (1,)), ((0,), (0,))),
        preferred_element_type=jnp.float32)                    # (2H, R, K)

    # heads stay on the leading axis; (H, B*T, K) -> (H*B, T, K) is tile-aligned.
    z = proj[0:H].reshape(H * B, T, K)        # x @ A_h          (scores left operand)
    v = proj[H:2 * H].reshape(H * B, T, K)    # x @ (wv_h wu_h)  (values, already unified)

    # ---- attention scores = (x A_h) x^T == q k^T, batched over (head, batch) ----
    xh = jnp.broadcast_to(x3[None], (H, B, T, K)).reshape(H * B, T, K)
    scores = lax.dot_general(
        z, xh, dimension_numbers=(((2,), (2,)), ((0,), (0,))),
        preferred_element_type=jnp.float32)                    # (H*B, T, T)

    # single batched softmax (one max/exp/sum/reciprocal for all heads & batches)
    m = jnp.max(scores, axis=-1, keepdims=True)
    e = jnp.exp(scores - m)
    s = jnp.sum(e, axis=-1, keepdims=True)
    p = e * pl.reciprocal(s, approx=False)    # exact, to keep tight tolerance

    attn = lax.dot_general(
        p, v, dimension_numbers=(((2,), (1,)), ((0,), (0,))),
        preferred_element_type=jnp.float32)                    # (H*B, T, K)

    # ---- unify heads: wu already folded into v, so just sum over heads + bias ----
    attended = jnp.sum(attn.reshape(H, R, K), axis=0) + vk_ref[0:1, :]   # (R, K)

    # ---- residual + LayerNorm 1 ----
    y = _layernorm(attended + x, vk_ref[1:2, :], vk_ref[2:3, :])

    # ---- feed-forward ----
    ff = jnp.dot(y, w1_ref[...], preferred_element_type=jnp.float32) + vff_ref[0:1, :]
    ff = jnp.maximum(ff, 0.0)
    ff = jnp.dot(ff, w2_ref[...], preferred_element_type=jnp.float32) + vk_ref[5:6, :]

    # ---- residual + LayerNorm 2, single store ----
    out = _layernorm(ff + y, vk_ref[3:4, :], vk_ref[4:5, :])
    o_ref[...] = out.reshape(B, T, K).astype(o_ref.dtype)


def pack_params(p, heads=HEADS):
    """Host-side packing: fold scale^2*wq@wk^T into A_h, fold wu into wv, split heads
    onto a leading axis, stack the small bias/gamma/beta vectors into 2-D slabs."""
    k = p["wq"].shape[0]
    scale2 = 1.0 / math.sqrt(k)                  # (k^{-1/4})^2

    def split_out_cols(w):  # (k, h*k) -> (h, k, k): head h = columns h*k:(h+1)*k
        return jnp.transpose(w.reshape(k, heads, k), (1, 0, 2))

    wq_h = split_out_cols(p["wq"])
    wk_h = split_out_cols(p["wk"])
    wv_h = split_out_cols(p["wv"])
    wu_h = p["wu"].reshape(heads, k, k)          # head h = rows h*k:(h+1)*k

    a_h = scale2 * jnp.einsum("hik,hjk->hij", wq_h, wk_h)    # scale^2 * wq_h @ wk_h^T
    wvu_h = jnp.einsum("hij,hjk->hik", wv_h, wu_h)           # wv_h @ wu_h
    w_heads = jnp.concatenate([a_h, wvu_h], axis=0)          # (2h, k, k)

    vk = jnp.stack([p["bu"], p["g1"], p["b1"], p["g2"], p["b2"], p["bb2"]], axis=0)  # (6, k)
    vff = p["bb1"].reshape(1, -1)                # (1, ff_hidden)
    return w_heads, p["w1"], p["w2"], vk, vff


def transformer_block(x, packed, *, batch_blocks=1):
    """batch_blocks=1: whole batch in one grid step (best on v5e/v6e, 1 TensorCore).
    batch_blocks=2: parallel batch axis to use both TensorCores on v7x."""
    B, T, K = x.shape
    wh, w1, w2, vk, vff = packed
    bb = B // batch_blocks

    full = lambda a: pl.BlockSpec(a.shape, lambda i: (0,) * a.ndim)
    in_specs = [
        pl.BlockSpec((bb, T, K), lambda i: (i, 0, 0)),
        full(wh), full(w1), full(w2), full(vk), full(vff),
    ]
    return pl.pallas_call(
        transformer_block_kernel,
        out_shape=jax.ShapeDtypeStruct((B, T, K), x.dtype),
        grid_spec=pltpu.PrefetchScalarGridSpec(
            num_scalar_prefetch=0,
            grid=(batch_blocks,),
            in_specs=in_specs,
            out_specs=pl.BlockSpec((bb, T, K), lambda i: (i, 0, 0)),
        ),
        compiler_params=pltpu.CompilerParams(
            dimension_semantics=("parallel" if batch_blocks > 1 else "arbitrary",)),
    )(x, wh, w1, w2, vk, vff)


def init_params(key, emb=EMB, heads=HEADS, ff_hidden=FF_HIDDEN):
    ks = jax.random.split(key, 10)

    def lin(k_, fan_in, fan_out):
        bound = 1.0 / math.sqrt(fan_in)
        return jax.random.uniform(k_, (fan_in, fan_out), jnp.float32, -bound, bound)

    params = {
        "wq": lin(ks[0], emb, emb * heads),
        "wk": lin(ks[1], emb, emb * heads),
        "wv": lin(ks[2], emb, emb * heads),
        "wu": lin(ks[3], emb * heads, emb),
        "bu": jax.random.uniform(ks[4], (emb,), jnp.float32,
                                 -1.0 / math.sqrt(emb * heads), 1.0 / math.sqrt(emb * heads)),
        "g1": jnp.ones((emb,), jnp.float32),
        "b1": jnp.zeros((emb,), jnp.float32),
        "w1": lin(ks[5], emb, ff_hidden),
        "bb1": jax.random.uniform(ks[6], (ff_hidden,), jnp.float32,
                                  -1.0 / math.sqrt(emb), 1.0 / math.sqrt(emb)),
        "w2": lin(ks[7], ff_hidden, emb),
        "bb2": jax.random.uniform(ks[8], (emb,), jnp.float32,
                                  -1.0 / math.sqrt(ff_hidden), 1.0 / math.sqrt(ff_hidden)),
        "g2": jnp.ones((emb,), jnp.float32),
        "b2": jnp.zeros((emb,), jnp.float32),
    }
    return params


def reference_block(x, p):
    """Plain-JAX reference matching the PyTorch forward exactly (no host-side folding)."""
    b, t, k = x.shape
    h = HEADS
    scale = 1.0 / (k ** 0.25)
    q = (x @ p["wq"]).reshape(b, t, h, k).transpose(0, 2, 1, 3) * scale
    ky = (x @ p["wk"]).reshape(b, t, h, k).transpose(0, 2, 1, 3) * scale
    v = (x @ p["wv"]).reshape(b, t, h, k).transpose(0, 2, 1, 3)
    dot = jnp.einsum("bhtk,bhsk->bhts", q, ky)
    dot = jax.nn.softmax(dot, axis=-1)
    out = jnp.einsum("bhts,bhsk->bhtk", dot, v).transpose(0, 2, 1, 3).reshape(b, t, h * k)
    attended = out @ p["wu"] + p["bu"]
    y = _layernorm(attended + x, p["g1"], p["b1"])
    ff = jnp.maximum(y @ p["w1"] + p["bb1"], 0.0) @ p["w2"] + p["bb2"]
    return _layernorm(ff + y, p["g2"], p["b2"])


if __name__ == "__main__":
    key = jax.random.PRNGKey(0)
    kx, kp = jax.random.split(key)
    x = jax.random.normal(kx, (BATCH, SEQ, EMB), jnp.float32)
    params = init_params(kp)
    packed = pack_params(params)

    out = transformer_block(x, packed)          # batch_blocks=2 recommended on v7x
    out = jax.block_until_ready(out)

    ref = reference_block(x, params)
    assert out.shape == (BATCH, SEQ, EMB)
    assert jnp.allclose(out, ref, rtol=2e-4, atol=1e-4), "mismatch vs plain-JAX reference"
    print("KERNEL_OK")
</pallas_src>

<mosaic_0001>
module attributes {stable_mosaic.version = 11 : i64} {
  func.func @transformer_block_kernel(%arg0: i32, %arg1: memref<2x8x32xf32, #tpu.memory_space<vmem>>, %arg2: memref<8x32x32xf32, #tpu.memory_space<vmem>>, %arg3: memref<32x128xf32, #tpu.memory_space<vmem>>, %arg4: memref<128x32xf32, #tpu.memory_space<vmem>>, %arg5: memref<6x32xf32, #tpu.memory_space<vmem>>, %arg6: memref<1x128xf32, #tpu.memory_space<vmem>>, %arg7: memref<2x8x32xf32, #tpu.memory_space<vmem>>) attributes {dimension_semantics = [#tpu.dimension_semantics<arbitrary>], iteration_bounds = array<i64: 1>, scalar_prefetch = 0 : i64, scratch_operands = 0 : i64, tpu.core_type = #tpu.core_type<tc>, window_params = [{transform_indices = @transform_0, window_bounds = array<i64: 2, 8, 32>}, {pipeline_mode = #tpu.pipeline_mode<synchronous>, transform_indices = @transform_1, window_bounds = array<i64: 8, 32, 32>}, {pipeline_mode = #tpu.pipeline_mode<synchronous>, transform_indices = @transform_2, window_bounds = array<i64: 32, 128>}, {pipeline_mode = #tpu.pipeline_mode<synchronous>, transform_indices = @transform_3, window_bounds = array<i64: 128, 32>}, {pipeline_mode = #tpu.pipeline_mode<synchronous>, transform_indices = @transform_4, window_bounds = array<i64: 6, 32>}, {pipeline_mode = #tpu.pipeline_mode<synchronous>, transform_indices = @transform_5, window_bounds = array<i64: 1, 128>}, {transform_indices = @transform_6, window_bounds = array<i64: 2, 8, 32>}]} {
    %c0 = arith.constant 0 : index
    %c0_0 = arith.constant 0 : index
    %c0_1 = arith.constant 0 : index
    %0 = vector.load %arg1[%c0, %c0_0, %c0_1] : memref<2x8x32xf32, #tpu.memory_space<vmem>>, vector<2x8x32xf32>
    %1 = vector.shape_cast %0 : vector<2x8x32xf32> to vector<16x32xf32>
    %c0_2 = arith.constant 0 : index
    %c0_3 = arith.constant 0 : index
    %c0_4 = arith.constant 0 : index
    %2 = vector.load %arg2[%c0_2, %c0_3, %c0_4] : memref<8x32x32xf32, #tpu.memory_space<vmem>>, vector<8x32x32xf32>
    %3 = vector.shape_cast %1 : vector<16x32xf32> to vector<1x16x32xf32>
    %4 = vector.shape_cast %3 : vector<1x16x32xf32> to vector<1x16x32xf32>
    %5 = vector.broadcast %4 : vector<1x16x32xf32> to vector<8x16x32xf32>
    %cst = arith.constant dense<0.000000e+00> : vector<8x16x32xf32>
    %6 = tpu.matmul %5, %2, %cst {dimension_numbers = #tpu.dot_dimension_numbers<[2], [1], [1], [2], [0, 0, 0, 1, 1, 2], [0], [0]>} : vector<8x16x32xf32>, vector<8x32x32xf32>, vector<8x16x32xf32> -> vector<8x16x32xf32>
    %7 = vector.extract_strided_slice %6 {offsets = [0, 0, 0], sizes = [4, 16, 32], strides = [1, 1, 1]} : vector<8x16x32xf32> to vector<4x16x32xf32>
    %8 = vector.shape_cast %7 : vector<4x16x32xf32> to vector<8x8x32xf32>
    %9 = vector.extract_strided_slice %6 {offsets = [4, 0, 0], sizes = [4, 16, 32], strides = [1, 1, 1]} : vector<8x16x32xf32> to vector<4x16x32xf32>
    %10 = vector.shape_cast %9 : vector<4x16x32xf32> to vector<8x8x32xf32>
    %11 = vector.shape_cast %0 : vector<2x8x32xf32> to vector<1x2x8x32xf32>
    %12 = vector.shape_cast %11 : vector<1x2x8x32xf32> to vector<1x2x8x32xf32>
    %13 = vector.broadcast %12 : vector<1x2x8x32xf32> to vector<4x2x8x32xf32>
    %14 = vector.shape_cast %13 : vector<4x2x8x32xf32> to vector<8x8x32xf32>
    %cst_5 = arith.constant dense<0.000000e+00> : vector<8x8x8xf32>
    %15 = tpu.matmul %8, %14, %cst_5 {dimension_numbers = #tpu.dot_dimension_numbers<[2], [2], [1], [1], [0, 0, 0, 1, 1, 1], [0], [0]>} : vector<8x8x32xf32>, vector<8x8x32xf32>, vector<8x8x8xf32> -> vector<8x8x8xf32>
    %cst_6 = arith.constant dense<0xFF800000> : vector<8x8xf32>
    %16 = vector.multi_reduction <maximumf>, %15, %cst_6 [2] : vector<8x8x8xf32> to vector<8x8xf32>
    %17 = vector.shape_cast %16 : vector<8x8xf32> to vector<8x8x1xf32>
    %18 = vector.broadcast %17 : vector<8x8x1xf32> to vector<8x8x8xf32>
    %19 = arith.subf %15, %18 : vector<8x8x8xf32>
    %20 = math.exp %19 : vector<8x8x8xf32>
    %cst_7 = arith.constant dense<0.000000e+00> : vector<8x8xf32>
    %21 = vector.multi_reduction <add>, %20, %cst_7 [2] : vector<8x8x8xf32> to vector<8x8xf32>
    %22 = vector.shape_cast %21 : vector<8x8xf32> to vector<8x8x1xf32>
    %23 = tpu.reciprocal %22 : vector<8x8x1xf32> -> vector<8x8x1xf32>
    %24 = vector.broadcast %23 : vector<8x8x1xf32> to vector<8x8x8xf32>
    %25 = arith.mulf %20, %24 : vector<8x8x8xf32>
    %cst_8 = arith.constant dense<0.000000e+00> : vector<8x8x32xf32>
    %26 = tpu.matmul %25, %10, %cst_8 {dimension_numbers = #tpu.dot_dimension_numbers<[2], [1], [1], [2], [0, 0, 0, 1, 1, 2], [0], [0]>} : vector<8x8x8xf32>, vector<8x8x32xf32>, vector<8x8x32xf32> -> vector<8x8x32xf32>
    %27 = vector.shape_cast %26 : vector<8x8x32xf32> to vector<4x16x32xf32>
    %cst_9 = arith.constant dense<0.000000e+00> : vector<16x32xf32>
    %28 = vector.multi_reduction <add>, %27, %cst_9 [0] : vector<4x16x32xf32> to vector<16x32xf32>
    %c0_10 = arith.constant 0 : index
    %c0_11 = arith.constant 0 : index
    %29 = vector.load %arg5[%c0_10, %c0_11] : memref<6x32xf32, #tpu.memory_space<vmem>>, vector<1x32xf32>
    %30 = vector.broadcast %29 : vector<1x32xf32> to vector<16x32xf32>
    %31 = arith.addf %28, %30 : vector<16x32xf32>
    %32 = arith.addf %31, %1 : vector<16x32xf32>
    %c1 = arith.constant 1 : index
    %c0_12 = arith.constant 0 : index
    %33 = vector.load %arg5[%c1, %c0_12] : memref<6x32xf32, #tpu.memory_space<vmem>>, vector<1x32xf32>
    %c2 = arith.constant 2 : index
    %c0_13 = arith.constant 0 : index
    %34 = vector.load %arg5[%c2, %c0_13] : memref<6x32xf32, #tpu.memory_space<vmem>>, vector<1x32xf32>
    %cst_14 = arith.constant dense<0.000000e+00> : vector<16xf32>
    %35 = vector.multi_reduction <add>, %32, %cst_14 [1] : vector<16x32xf32> to vector<16xf32>
    %36 = vector.shape_cast %35 : vector<16xf32> to vector<16x1xf32>
    %cst_15 = arith.constant 3.200000e+01 : f32
    %37 = vector.broadcast %cst_15 : f32 to vector<16x1xf32>
    %38 = arith.divf %36, %37 : vector<16x1xf32>
    %39 = vector.broadcast %38 : vector<16x1xf32> to vector<16x32xf32>
    %40 = arith.subf %32, %39 : vector<16x32xf32>
    %41 = arith.mulf %40, %40 : vector<16x32xf32>
    %cst_16 = arith.constant dense<0.000000e+00> : vector<16xf32>
    %42 = vector.multi_reduction <add>, %41, %cst_16 [1] : vector<16x32xf32> to vector<16xf32>
    %43 = vector.shape_cast %42 : vector<16xf32> to vector<16x1xf32>
    %cst_17 = arith.constant 3.200000e+01 : f32
    %44 = vector.broadcast %cst_17 : f32 to vector<16x1xf32>
    %45 = arith.divf %43, %44 : vector<16x1xf32>
    %46 = vector.broadcast %38 : vector<16x1xf32> to vector<16x32xf32>
    %47 = arith.subf %32, %46 : vector<16x32xf32>
    %cst_18 = arith.constant 9.99999974E-6 : f32
    %48 = vector.broadcast %cst_18 : f32 to vector<16x1xf32>
    %49 = arith.addf %45, %48 : vector<16x1xf32>
    %50 = math.rsqrt %49 : vector<16x1xf32>
    %51 = vector.broadcast %50 : vector<16x1xf32> to vector<16x32xf32>
    %52 = arith.mulf %47, %51 : vector<16x32xf32>
    %53 = vector.broadcast %33 : vector<1x32xf32> to vector<16x32xf32>
    %54 = arith.mulf %52, %53 : vector<16x32xf32>
    %55 = vector.broadcast %34 : vector<1x32xf32> to vector<16x32xf32>
    %56 = arith.addf %54, %55 : vector<16x32xf32>
    %c0_19 = arith.constant 0 : index
    %c0_20 = arith.constant 0 : index
    %57 = vector.load %arg3[%c0_19, %c0_20] : memref<32x128xf32, #tpu.memory_space<vmem>>, vector<32x128xf32>
    %cst_21 = arith.constant dense<0.000000e+00> : vector<16x128xf32>
    %58 = tpu.matmul %56, %57, %cst_21 {dimension_numbers = #tpu.dot_dimension_numbers<[1], [0], [0], [1], [0, 0, 1, 1], [], []>} : vector<16x32xf32>, vector<32x128xf32>, vector<16x128xf32> -> vector<16x128xf32>
    %c0_22 = arith.constant 0 : index
    %c0_23 = arith.constant 0 : index
    %59 = vector.load %arg6[%c0_22, %c0_23] : memref<1x128xf32, #tpu.memory_space<vmem>>, vector<1x128xf32>
    %60 = vector.broadcast %59 : vector<1x128xf32> to vector<16x128xf32>
    %61 = arith.addf %58, %60 : vector<16x128xf32>
    %cst_24 = arith.constant 0.000000e+00 : f32
    %62 = vector.broadcast %cst_24 : f32 to vector<16x128xf32>
    %63 = arith.maximumf %61, %62 : vector<16x128xf32>
    %c0_25 = arith.constant 0 : index
    %c0_26 = arith.constant 0 : index
    %64 = vector.load %arg4[%c0_25, %c0_26] : memref<128x32xf32, #tpu.memory_space<vmem>>, vector<128x32xf32>
    %cst_27 = arith.constant dense<0.000000e+00> : vector<16x32xf32>
    %65 = tpu.matmul %63, %64, %cst_27 {dimension_numbers = #tpu.dot_dimension_numbers<[1], [0], [0], [1], [0, 0, 1, 1], [], []>} : vector<16x128xf32>, vector<128x32xf32>, vector<16x32xf32> -> vector<16x32xf32>
    %c5 = arith.constant 5 : index
    %c0_28 = arith.constant 0 : index
    %66 = vector.load %arg5[%c5, %c0_28] : memref<6x32xf32, #tpu.memory_space<vmem>>, vector<1x32xf32>
    %67 = vector.broadcast %66 : vector<1x32xf32> to vector<16x32xf32>
    %68 = arith.addf %65, %67 : vector<16x32xf32>
    %69 = arith.addf %68, %56 : vector<16x32xf32>
    %c3 = arith.constant 3 : index
    %c0_29 = arith.constant 0 : index
    %70 = vector.load %arg5[%c3, %c0_29] : memref<6x32xf32, #tpu.memory_space<vmem>>, vector<1x32xf32>
    %c4 = arith.constant 4 : index
    %c0_30 = arith.constant 0 : index
    %71 = vector.load %arg5[%c4, %c0_30] : memref<6x32xf32, #tpu.memory_space<vmem>>, vector<1x32xf32>
    %cst_31 = arith.constant dense<0.000000e+00> : vector<16xf32>
    %72 = vector.multi_reduction <add>, %69, %cst_31 [1] : vector<16x32xf32> to vector<16xf32>
    %73 = vector.shape_cast %72 : vector<16xf32> to vector<16x1xf32>
    %cst_32 = arith.constant 3.200000e+01 : f32
    %74 = vector.broadcast %cst_32 : f32 to vector<16x1xf32>
    %75 = arith.divf %73, %74 : vector<16x1xf32>
    %76 = vector.broadcast %75 : vector<16x1xf32> to vector<16x32xf32>
    %77 = arith.subf %69, %76 : vector<16x32xf32>
    %78 = arith.mulf %77, %77 : vector<16x32xf32>
    %cst_33 = arith.constant dense<0.000000e+00> : vector<16xf32>
    %79 = vector.multi_reduction <add>, %78, %cst_33 [1] : vector<16x32xf32> to vector<16xf32>
    %80 = vector.shape_cast %79 : vector<16xf32> to vector<16x1xf32>
    %cst_34 = arith.constant 3.200000e+01 : f32
    %81 = vector.broadcast %cst_34 : f32 to vector<16x1xf32>
    %82 = arith.divf %80, %81 : vector<16x1xf32>
    %83 = vector.broadcast %75 : vector<16x1xf32> to vector<16x32xf32>
    %84 = arith.subf %69, %83 : vector<16x32xf32>
    %cst_35 = arith.constant 9.99999974E-6 : f32
    %85 = vector.broadcast %cst_35 : f32 to vector<16x1xf32>
    %86 = arith.addf %82, %85 : vector<16x1xf32>
    %87 = math.rsqrt %86 : vector<16x1xf32>
    %88 = vector.broadcast %87 : vector<16x1xf32> to vector<16x32xf32>
    %89 = arith.mulf %84, %88 : vector<16x32xf32>
    %90 = vector.broadcast %70 : vector<1x32xf32> to vector<16x32xf32>
    %91 = arith.mulf %89, %90 : vector<16x32xf32>
    %92 = vector.broadcast %71 : vector<1x32xf32> to vector<16x32xf32>
    %93 = arith.addf %91, %92 : vector<16x32xf32>
    %94 = vector.shape_cast %93 : vector<16x32xf32> to vector<2x8x32xf32>
    %c0_36 = arith.constant 0 : index
    %c0_37 = arith.constant 0 : index
    %c0_38 = arith.constant 0 : index
    %95 = vector.load %arg7[%c0_36, %c0_37, %c0_38] : memref<2x8x32xf32, #tpu.memory_space<vmem>>, vector<2x8x32xf32>
    tpu.vector_store %arg7[%c0_36, %c0_37, %c0_38], %94 {strides = array<i32>} : memref<2x8x32xf32, #tpu.memory_space<vmem>>, vector<2x8x32xf32>,
    return
  }
  func.func @transform_0(%arg0: i32) -> (i32, i32, i32) {
    %c0_i32 = arith.constant 0 : i32
    %c0_i32_0 = arith.constant 0 : i32
    %c0_i32_1 = arith.constant 0 : i32
    return %arg0, %c0_i32, %c0_i32_0 : i32, i32, i32
  }
  func.func @transform_1(%arg0: i32) -> (i32, i32, i32) {
    %c0_i32 = arith.constant 0 : i32
    %c0_i32_0 = arith.constant 0 : i32
    %c0_i32_1 = arith.constant 0 : i32
    %c0_i32_2 = arith.constant 0 : i32
    return %c0_i32, %c0_i32_0, %c0_i32_1 : i32, i32, i32
  }
  func.func @transform_2(%arg0: i32) -> (i32, i32) {
    %c0_i32 = arith.constant 0 : i32
    %c0_i32_0 = arith.constant 0 : i32
    %c0_i32_1 = arith.constant 0 : i32
    return %c0_i32, %c0_i32_0 : i32, i32
  }
  func.func @transform_3(%arg0: i32) -> (i32, i32) {
    %c0_i32 = arith.constant 0 : i32
    %c0_i32_0 = arith.constant 0 : i32
    %c0_i32_1 = arith.constant 0 : i32
    return %c0_i32, %c0_i32_0 : i32, i32
  }
  func.func @transform_4(%arg0: i32) -> (i32, i32) {
    %c0_i32 = arith.constant 0 : i32
    %c0_i32_0 = arith.constant 0 : i32
    %c0_i32_1 = arith.constant 0 : i32
    return %c0_i32, %c0_i32_0 : i32, i32
  }
  func.func @transform_5(%arg0: i32) -> (i32, i32) {
    %c0_i32 = arith.constant 0 : i32
    %c0_i32_0 = arith.constant 0 : i32
    %c0_i32_1 = arith.constant 0 : i32
    return %c0_i32, %c0_i32_0 : i32, i32
  }
  func.func @transform_6(%arg0: i32) -> (i32, i32, i32) {
    %c0_i32 = arith.constant 0 : i32
    %c0_i32_0 = arith.constant 0 : i32
    %c0_i32_1 = arith.constant 0 : i32
    return %arg0, %c0_i32, %c0_i32_0 : i32, i32, i32
  }
}

</mosaic_0001>

<llo_original>
// kernel: tpu_custom_call.1
$region0: #{tpu_custom_call.1}
  #allocation0 [shape = 'u32[]', space=smem, size = 0x4, offset = 0x4, fixed_abs, tag = 'smem constant byte address 0x4 - core index']
  #allocation1 [shape = 'u32[144,128]{1,0:T(1,128)}', space=vmem, size = 0x12000, scoped, tag = 'internal scratch']
  %s0 = inlined_call_operand.vmem [shape: f32[2,8,32], index: 0, kind: input, shape index: {}]
  %s1 = inlined_call_operand.hbm [shape: f32[8,32,32], index: 1, kind: input, shape index: {}]
  %s2 = inlined_call_operand.vmem [shape: f32[32,128], index: 2, kind: input, shape index: {}]
  %s3 = inlined_call_operand.vmem [shape: f32[128,32], index: 3, kind: input, shape index: {}]
  %s4 = inlined_call_operand.vmem [shape: f32[6,32], index: 4, kind: input, shape index: {}]
  %s5 = inlined_call_operand.vmem [shape: f32[1,128], index: 5, kind: input, shape index: {}]
  %s6 = inlined_call_operand.hbm [shape: f32[2,8,32], index: 6, kind: output, shape index: {}]
  %s7 = sld [smem:[#allocation0]]
  $region38: #{tpu_custom_call.1} parent=0
    _
  %s9 = ssub.s32 1, %s7
  %s10 = scalar_select 0, %s9, %s7
  $region1: #{tpu_custom_call.1} parent=0
    #allocation2 [shape = 'u8[131072]{0}', space=vmem, size = 0x20000, scoped, tag = 'input window, operand 1, single buffered']
    #allocation3 [shape = 's32[1]{0}', space=sflag, size = 0x4, scoped, tag = 'scoped memory for tpu_custom_call.1']
    #allocation4 [shape = 's32[1]{0}', space=sflag, size = 0x4, scoped, tag = 'scoped memory for tpu_custom_call.1']
    #allocation5 [shape = 'u8[8192]{0}', space=vmem, size = 0x2000, scoped, tag = 'output window, operand 0, single buffered']
    %11 = vsyncpa [#allocation3], 0
    %12 = vsyncpa [#allocation4], 0
    // Predicated region
    $region2: #{tpu_custom_call.1} parent=1 // pred_check
      _
    $region3: #{tpu_custom_call.1} parent=1 // pred_check_branch
      %14 = sbr.rel (0) target = $region5
    $region4: #{tpu_custom_call.1} parent=1 // pred_region
      _
    $region5: #{tpu_custom_call.1} parent=1 // pred_fallthru
      _
    // Predicated region
    $region6: #{tpu_custom_call.1} parent=1 // pred_check
      _
    $region7: #{tpu_custom_call.1} parent=1 // pred_check_branch
      %16 = sbr.rel (0) target = $region9
    $region8: #{tpu_custom_call.1} parent=1 // pred_region
      %s18 = ssub.s32 4096, 4096
      %19 = vsyncadd [#allocation3], %s18
      %s20 = sshll.u32 [#allocation2], 4
      %s21 = int_to_ptr.vmem [resolvable:$true] %s20
      %26 = dma.hbm_to_vmem [thread:$0]  %s1, 4096, %s21, [#allocation3], 128, 128, 8
    $region9: #{tpu_custom_call.1} parent=1 // pred_fallthru
      _
    // Predicated region
    $region10: #{tpu_custom_call.1} parent=1 // pred_check
      _
    $region11: #{tpu_custom_call.1} parent=1 // pred_check_branch
      %28 = sbr.rel (0) target = $region13
    $region12: #{tpu_custom_call.1} parent=1 // pred_region
      _
    $region13: #{tpu_custom_call.1} parent=1 // pred_fallthru
      _
    // Predicated region
    $region14: #{tpu_custom_call.1} parent=1 // pred_check
      _
    $region15: #{tpu_custom_call.1} parent=1 // pred_check_branch
      %30 = sbr.rel (0) target = $region17
    $region16: #{tpu_custom_call.1} parent=1 // pred_region
      _
    $region17: #{tpu_custom_call.1} parent=1 // pred_fallthru
      _
    // Predicated region
    $region18: #{tpu_custom_call.1} parent=1 // pred_check
      _
    $region19: #{tpu_custom_call.1} parent=1 // pred_check_branch
      %32 = sbr.rel (0) target = $region21
    $region20: #{tpu_custom_call.1} parent=1 // pred_region
      _
    $region21: #{tpu_custom_call.1} parent=1 // pred_fallthru
      _
    // Predicated region
    $region22: #{tpu_custom_call.1} parent=1 // pred_check
      _
    $region23: #{tpu_custom_call.1} parent=1 // pred_check_branch
      %34 = sbr.rel (0) target = $region25
    $region24: #{tpu_custom_call.1} parent=1 // pred_region
      _
    $region25: #{tpu_custom_call.1} parent=1 // pred_fallthru
      _
    // Predicated region
    $region26: #{tpu_custom_call.1} parent=1 // pred_check
      _
    $region27: #{tpu_custom_call.1} parent=1 // pred_check_branch
      %36 = sbr.rel (0) target = $region29
    $region28: #{tpu_custom_call.1} parent=1 // pred_region
      %37 = dma.done [#allocation3], 4096
    $region29: #{tpu_custom_call.1} parent=1 // pred_fallthru
      _
    %v38 = vld [vmem:[%s0] sm:$0xff]
    %v39 = vld [vmem:[%s0 + $0x8] sm:$0xff]
    %v40 = vld [vmem:[#allocation2] sm:$0xff]
    %v41 = vld [vmem:[#allocation2 + $0x8] sm:$0xff]
    %v42 = vld [vmem:[#allocation2 + $0x10] sm:$0xff]
    %v43 = vld [vmem:[#allocation2 + $0x18] sm:$0xff]
    %v44 = vld [vmem:[#allocation2 + $0x20] sm:$0xff]
    %v45 = vld [vmem:[#allocation2 + $0x28] sm:$0xff]
    %v46 = vld [vmem:[#allocation2 + $0x30] sm:$0xff]
    %v47 = vld [vmem:[#allocation2 + $0x38] sm:$0xff]
    %v48 = vld [vmem:[#allocation2 + $0x40] sm:$0xff]
    %v49 = vld [vmem:[#allocation2 + $0x48] sm:$0xff]
    %v50 = vld [vmem:[#allocation2 + $0x50] sm:$0xff]
    %v51 = vld [vmem:[#allocation2 + $0x58] sm:$0xff]
    %v52 = vld [vmem:[#allocation2 + $0x60] sm:$0xff]
    %v53 = vld [vmem:[#allocation2 + $0x68] sm:$0xff]
    %v54 = vld [vmem:[#allocation2 + $0x70] sm:$0xff]
    %v55 = vld [vmem:[#allocation2 + $0x78] sm:$0xff]
    %v56 = vld [vmem:[#allocation2 + $0x80] sm:$0xff]
    %v57 = vld [vmem:[#allocation2 + $0x88] sm:$0xff]
    %v58 = vld [vmem:[#allocation2 + $0x90] sm:$0xff]
    %v59 = vld [vmem:[#allocation2 + $0x98] sm:$0xff]
    %v60 = vld [vmem:[#allocation2 + $0xa0] sm:$0xff]
    %v61 = vld [vmem:[#allocation2 + $0xa8] sm:$0xff]
    %v62 = vld [vmem:[#allocation2 + $0xb0] sm:$0xff]
    %v63 = vld [vmem:[#allocation2 + $0xb8] sm:$0xff]
    %v64 = vld [vmem:[#allocation2 + $0xc0] sm:$0xff]
    %v65 = vld [vmem:[#allocation2 + $0xc8] sm:$0xff]
    %v66 = vld [vmem:[#allocation2 + $0xd0] sm:$0xff]
    %v67 = vld [vmem:[#allocation2 + $0xd8] sm:$0xff]
    %v68 = vld [vmem:[#allocation2 + $0xe0] sm:$0xff]
    %v69 = vld [vmem:[#allocation2 + $0xe8] sm:$0xff]
    %v70 = vld [vmem:[#allocation2 + $0xf0] sm:$0xff]
    %v71 = vld [vmem:[#allocation2 + $0xf8] sm:$0xff]
    %vm72 = vcmask 261120
    %v74 = vsel %vm72, %v38, 0
    %v77 = vsel %vm72, %v39, 0
    %79 = vmatprep.subr.mxu0 0.0
    %80 = vmatpush1.msra.mxu0 %v40
    %81 = vmatprep.subr.mxu0 0.0
    %82 = vmatpush1.msra.mxu0 %v41
    %83 = vmatprep.subr.mxu0 0.0
    %84 = vmatpush1.msra.mxu0 %v42
    %85 = vmatprep.subr.mxu0 0.0
    %86 = vmatpush1.msra.mxu0 %v43
    %87 = vmatprep.subr.mxu0 0.0
    %88 = vmatpush1.msra.mxu0 0.0
    %89 = vmatprep.subr.mxu0 0.0
    %90 = vmatpush1.msra.mxu0 0.0
    %91 = vmatprep.subr.mxu0 0.0
    %92 = vmatpush1.msra.mxu0 0.0
    %93 = vmatprep.subr.mxu0 0.0
    %94 = vmatpush1.msra.mxu0 0.0
    %95 = vmatprep.subr.mxu0 0.0
    %96 = vmatpush1.msra.mxu0 0.0
    %97 = vmatprep.subr.mxu0 0.0
    %98 = vmatpush1.msra.mxu0 0.0
    %99 = vmatprep.subr.mxu0 0.0
    %100 = vmatpush1.msra.mxu0 0.0
    %101 = vmatprep.subr.mxu0 0.0
    %102 = vmatpush1.msra.mxu0 0.0
    %103 = vmatprep.subr.mxu0 0.0
    %104 = vmatpush1.msra.mxu0 0.0
    %105 = vmatprep.subr.mxu0 0.0
    %106 = vmatpush1.msra.mxu0 0.0
    %107 = vmatprep.subr.mxu0 0.0
    %108 = vmatpush1.msra.mxu0 0.0
    %109 = vmatprep.subr.mxu0 0.0
    %110 = vmatpush1.msra.mxu0 0.0
    %111 = vmatprep.subr.mxu0 0.0
    %112 = vmatpush1.msra.mxu0 0.0
    %113 = vmatprep.subr.mxu0 0.0
    %114 = vmatpush1.msra.mxu0 0.0
    %115 = vmatprep.subr.mxu0 0.0
    %116 = vmatpush1.msra.mxu0 0.0
    %117 = vmatprep.subr.mxu0 0.0
    %118 = vmatpush1.msra.mxu0 0.0
    %119 = vmatprep.subr.mxu0 0.0
    %120 = vmatpush1.msra.mxu0 0.0
    %121 = vmatprep.subr.mxu0 0.0
    %122 = vmatpush1.msra.mxu0 0.0
    %123 = vmatprep.subr.mxu0 0.0
    %124 = vmatpush1.msra.mxu0 0.0
    %125 = vmatprep.subr.mxu0 0.0
    %126 = vmatpush1.msra.mxu0 0.0
    %127 = vmatprep.subr.mxu0 0.0
    %128 = vmatpush1.msra.mxu0 0.0
    %129 = vmatprep.subr.mxu0 0.0
    %130 = vmatpush1.msra.mxu0 0.0
    %131 = vmatprep.subr.mxu0 0.0
    %132 = vmatpush1.msra.mxu0 0.0
    %133 = vmatprep.subr.mxu0 0.0
    %134 = vmatpush1.msra.mxu0 0.0
    %135 = vmatprep.subr.mxu0 0.0
    %136 = vmatpush1.msra.mxu0 0.0
    %137 = vmatprep.subr.mxu0 0.0
    %138 = vmatpush1.msra.mxu0 0.0
    %139 = vmatprep.subr.mxu0 0.0
    %140 = vmatpush1.msra.mxu0 0.0
    %141 = vmatprep.subr.mxu0 0.0
    %142 = vmatpush1.msra.mxu0 0.0
    %143 = vmatprep.mubr.f32.mxu0 0.0
    %144 = vmatmul.mubr.f32.gmra.mrb[0].mxu0 %v74
    %v145 = vpop.f32.mrb[0].mxu0
    %v146 = vadd.f32 0.0, %v145
    %v147 = vpop.f32.mrb[0].mxu0
    %148 = vmatprep.mubr.f32.mxu0 0.0
    %149 = vmatmul.mubr.f32.gmra.mrb[0].mxu0 %v77
    %v150 = vpop.f32.mrb[0].mxu0
    %v151 = vadd.f32 0.0, %v150
    %v152 = vpop.f32.mrb[0].mxu0
    %153 = vdwg.mxu0
    %154 = vmatprep.subr.mxu0 0.0
    %155 = vmatpush1.msra.mxu0 %v44
    %156 = vmatprep.subr.mxu0 0.0
    %157 = vmatpush1.msra.mxu0 %v45
    %158 = vmatprep.subr.mxu0 0.0
    %159 = vmatpush1.msra.mxu0 %v46
    %160 = vmatprep.subr.mxu0 0.0
    %161 = vmatpush1.msra.mxu0 %v47
    %162 = vmatprep.subr.mxu0 0.0
    %163 = vmatpush1.msra.mxu0 0.0
    %164 = vmatprep.subr.mxu0 0.0
    %165 = vmatpush1.msra.mxu0 0.0
    %166 = vmatprep.subr.mxu0 0.0
    %167 = vmatpush1.msra.mxu0 0.0
    %168 = vmatprep.subr.mxu0 0.0
    %169 = vmatpush1.msra.mxu0 0.0
    %170 = vmatprep.subr.mxu0 0.0
    %171 = vmatpush1.msra.mxu0 0.0
    %172 = vmatprep.subr.mxu0 0.0
    %173 = vmatpush1.msra.mxu0 0.0
    %174 = vmatprep.subr.mxu0 0.0
    %175 = vmatpush1.msra.mxu0 0.0
    %176 = vmatprep.subr.mxu0 0.0
    %177 = vmatpush1.msra.mxu0 0.0
    %178 = vmatprep.subr.mxu0 0.0
    %179 = vmatpush1.msra.mxu0 0.0
    %180 = vmatprep.subr.mxu0 0.0
    %181 = vmatpush1.msra.mxu0 0.0
    %182 = vmatprep.subr.mxu0 0.0
    %183 = vmatpush1.msra.mxu0 0.0
    %184 = vmatprep.subr.mxu0 0.0
    %185 = vmatpush1.msra.mxu0 0.0
    %186 = vmatprep.subr.mxu0 0.0
    %187 = vmatpush1.msra.mxu0 0.0
    %188 = vmatprep.subr.mxu0 0.0
    %189 = vmatpush1.msra.mxu0 0.0
    %190 = vmatprep.subr.mxu0 0.0
    %191 = vmatpush1.msra.mxu0 0.0
    %192 = vmatprep.subr.mxu0 0.0
    %193 = vmatpush1.msra.mxu0 0.0
    %194 = vmatprep.subr.mxu0 0.0
    %195 = vmatpush1.msra.mxu0 0.0
    %196 = vmatprep.subr.mxu0 0.0
    %197 = vmatpush1.msra.mxu0 0.0
    %198 = vmatprep.subr.mxu0 0.0
    %199 = vmatpush1.msra.mxu0 0.0
    %200 = vmatprep.subr.mxu0 0.0
    %201 = vmatpush1.msra.mxu0 0.0
    %202 = vmatprep.subr.mxu0 0.0
    %203 = vmatpush1.msra.mxu0 0.0
    %204 = vmatprep.subr.mxu0 0.0
    %205 = vmatpush1.msra.mxu0 0.0
    %206 = vmatprep.subr.mxu0 0.0
    %207 = vmatpush1.msra.mxu0 0.0
    %208 = vmatprep.subr.mxu0 0.0
    %209 = vmatpush1.msra.mxu0 0.0
    %210 = vmatprep.subr.mxu0 0.0
    %211 = vmatpush1.msra.mxu0 0.0
    %212 = vmatprep.subr.mxu0 0.0
    %213 = vmatpush1.msra.mxu0 0.0
    %214 = vmatprep.subr.mxu0 0.0
    %215 = vmatpush1.msra.mxu0 0.0
    %216 = vmatprep.subr.mxu0 0.0
    %217 = vmatpush1.msra.mxu0 0.0
    %218 = vmatprep.mubr.f32.mxu0 0.0
    %219 = vmatmul.mubr.f32.gmra.mrb[0].mxu0 %v74
    %v220 = vpop.f32.mrb[0].mxu0
    %v221 = vadd.f32 0.0, %v220
    %v222 = vpop.f32.mrb[0].mxu0
    %223 = vmatprep.mubr.f32.mxu0 0.0
    %224 = vmatmul.mubr.f32.gmra.mrb[0].mxu0 %v77
    %v225 = vpop.f32.mrb[0].mxu0
    %v226 = vadd.f32 0.0, %v225
    %v227 = vpop.f32.mrb[0].mxu0
    %228 = vdwg.mxu0
    %229 = vmatprep.subr.mxu0 0.0
    %230 = vmatpush1.msra.mxu0 %v48
    %231 = vmatprep.subr.mxu0 0.0
    %232 = vmatpush1.msra.mxu0 %v49
    %233 = vmatprep.subr.mxu0 0.0
    %234 = vmatpush1.msra.mxu0 %v50
    %235 = vmatprep.subr.mxu0 0.0
    %236 = vmatpush1.msra.mxu0 %v51
    %237 = vmatprep.subr.mxu0 0.0
    %238 = vmatpush1.msra.mxu0 0.0
    %239 = vmatprep.subr.mxu0 0.0
    %240 = vmatpush1.msra.mxu0 0.0
    %241 = vmatprep.subr.mxu0 0.0
    %242 = vmatpush1.msra.mxu0 0.0
    %243 = vmatprep.subr.mxu0 0.0
    %244 = vmatpush1.msra.mxu0 0.0
    %245 = vmatprep.subr.mxu0 0.0
    %246 = vmatpush1.msra.mxu0 0.0
    %247 = vmatprep.subr.mxu0 0.0
    %248 = vmatpush1.msra.mxu0 0.0
    %249 = vmatprep.subr.mxu0 0.0
    %250 = vmatpush1.msra.mxu0 0.0
    %251 = vmatprep.subr.mxu0 0.0
    %252 = vmatpush1.msra.mxu0 0.0
    %253 = vmatprep.subr.mxu0 0.0
    %254 = vmatpush1.msra.mxu0 0.0
    %255 = vmatprep.subr.mxu0 0.0
    %256 = vmatpush1.msra.mxu0 0.0
    %257 = vmatprep.subr.mxu0 0.0
    %258 = vmatpush1.msra.mxu0 0.0
    %259 = vmatprep.subr.mxu0 0.0
    %260 = vmatpush1.msra.mxu0 0.0
    %261 = vmatprep.subr.mxu0 0.0
    %262 = vmatpush1.msra.mxu0 0.0
    %263 = vmatprep.subr.mxu0 0.0
    %264 = vmatpush1.msra.mxu0 0.0
    %265 = vmatprep.subr.mxu0 0.0
    %266 = vmatpush1.msra.mxu0 0.0
    %267 = vmatprep.subr.mxu0 0.0
    %268 = vmatpush1.msra.mxu0 0.0
    %269 = vmatprep.subr.mxu0 0.0
    %270 = vmatpush1.msra.mxu0 0.0
    %271 = vmatprep.subr.mxu0 0.0
    %272 = vmatpush1.msra.mxu0 0.0
    %273 = vmatprep.subr.mxu0 0.0
    %274 = vmatpush1.msra.mxu0 0.0
    %275 = vmatprep.subr.mxu0 0.0
    %276 = vmatpush1.msra.mxu0 0.0
    %277 = vmatprep.subr.mxu0 0.0
    %278 = vmatpush1.msra.mxu0 0.0
    %279 = vmatprep.subr.mxu0 0.0
    %280 = vmatpush1.msra.mxu0 0.0
    %281 = vmatprep.subr.mxu0 0.0
    %282 = vmatpush1.msra.mxu0 0.0
    %283 = vmatprep.subr.mxu0 0.0
    %284 = vmatpush1.msra.mxu0 0.0
    %285 = vmatprep.subr.mxu0 0.0
    %286 = vmatpush1.msra.mxu0 0.0
    %287 = vmatprep.subr.mxu0 0.0
    %288 = vmatpush1.msra.mxu0 0.0
    %289 = vmatprep.subr.mxu0 0.0
    %290 = vmatpush1.msra.mxu0 0.0
    %291 = vmatprep.subr.mxu0 0.0
    %292 = vmatpush1.msra.mxu0 0.0
    %293 = vmatprep.mubr.f32.mxu0 0.0
    %294 = vmatmul.mubr.f32.gmra.mrb[0].mxu0 %v74
    %v295 = vpop.f32.mrb[0].mxu0
    %v296 = vadd.f32 0.0, %v295
    %v297 = vpop.f32.mrb[0].mxu0
    %298 = vmatprep.mubr.f32.mxu0 0.0
    %299 = vmatmul.mubr.f32.gmra.mrb[0].mxu0 %v77
    %v300 = vpop.f32.mrb[0].mxu0
    %v301 = vadd.f32 0.0, %v300
    %v302 = vpop.f32.mrb[0].mxu0
    %303 = vdwg.mxu0
    %304 = vmatprep.subr.mxu0 0.0
    %305 = vmatpush1.msra.mxu0 %v52
    %306 = vmatprep.subr.mxu0 0.0
    %307 = vmatpush1.msra.mxu0 %v53
    %308 = vmatprep.subr.mxu0 0.0
    %309 = vmatpush1.msra.mxu0 %v54
    %310 = vmatprep.subr.mxu0 0.0
    %311 = vmatpush1.msra.mxu0 %v55
    %312 = vmatprep.subr.mxu0 0.0
    %313 = vmatpush1.msra.mxu0 0.0
    %314 = vmatprep.subr.mxu0 0.0
    %315 = vmatpush1.msra.mxu0 0.0
    %316 = vmatprep.subr.mxu0 0.0
    %317 = vmatpush1.msra.mxu0 0.0
    %318 = vmatprep.subr.mxu0 0.0
    %319 = vmatpush1.msra.mxu0 0.0
    %320 = vmatprep.subr.mxu0 0.0
    %321 = vmatpush1.msra.mxu0 0.0
    %322 = vmatprep.subr.mxu0 0.0
    %323 = vmatpush1.msra.mxu0 0.0
    %324 = vmatprep.subr.mxu0 0.0
    %325 = vmatpush1.msra.mxu0 0.0
    %326 = vmatprep.subr.mxu0 0.0
    %327 = vmatpush1.msra.mxu0 0.0
    %328 = vmatprep.subr.mxu0 0.0
    %329 = vmatpush1.msra.mxu0 0.0
    %330 = vmatprep.subr.mxu0 0.0
    %331 = vmatpush1.msra.mxu0 0.0
    %332 = vmatprep.subr.mxu0 0.0
    %333 = vmatpush1.msra.mxu0 0.0
    %334 = vmatprep.subr.mxu0 0.0
    %335 = vmatpush1.msra.mxu0 0.0
    %336 = vmatprep.subr.mxu0 0.0
    %337 = vmatpush1.msra.mxu0 0.0
    %338 = vmatprep.subr.mxu0 0.0
    %339 = vmatpush1.msra.mxu0 0.0
    %340 = vmatprep.subr.mxu0 0.0
    %341 = vmatpush1.msra.mxu0 0.0
    %342 = vmatprep.subr.mxu0 0.0
    %343 = vmatpush1.msra.mxu0 0.0
    %344 = vmatprep.subr.mxu0 0.0
    %345 = vmatpush1.msra.mxu0 0.0
    %346 = vmatprep.subr.mxu0 0.0
    %347 = vmatpush1.msra.mxu0 0.0
    %348 = vmatprep.subr.mxu0 0.0
    %349 = vmatpush1.msra.mxu0 0.0
    %350 = vmatprep.subr.mxu0 0.0
    %351 = vmatpush1.msra.mxu0 0.0
    %352 = vmatprep.subr.mxu0 0.0
    %353 = vmatpush1.msra.mxu0 0.0
    %354 = vmatprep.subr.mxu0 0.0
    %355 = vmatpush1.msra.mxu0 0.0
    %356 = vmatprep.subr.mxu0 0.0
    %357 = vmatpush1.msra.mxu0 0.0
    %358 = vmatprep.subr.mxu0 0.0
    %359 = vmatpush1.msra.mxu0 0.0
    %360 = vmatprep.subr.mxu0 0.0
    %361 = vmatpush1.msra.mxu0 0.0
    %362 = vmatprep.subr.mxu0 0.0
    %363 = vmatpush1.msra.mxu0 0.0
    %364 = vmatprep.subr.mxu0 0.0
    %365 = vmatpush1.msra.mxu0 0.0
    %366 = vmatprep.subr.mxu0 0.0
    %367 = vmatpush1.msra.mxu0 0.0
    %368 = vmatprep.mubr.f32.mxu0 0.0
    %369 = vmatmul.mubr.f32.gmra.mrb[0].mxu0 %v74
    %v370 = vpop.f32.mrb[0].mxu0
    %v371 = vadd.f32 0.0, %v370
    %v372 = vpop.f32.mrb[0].mxu0
    %373 = vmatprep.mubr.f32.mxu0 0.0
    %374 = vmatmul.mubr.f32.gmra.mrb[0].mxu0 %v77
    %v375 = vpop.f32.mrb[0].mxu0
    %v376 = vadd.f32 0.0, %v375
    %v377 = vpop.f32.mrb[0].mxu0
    %378 = vdwg.mxu0
    %379 = vmatprep.subr.mxu0 0.0
    %380 = vmatpush1.msra.mxu0 %v56
    %381 = vmatprep.subr.mxu0 0.0
    %382 = vmatpush1.msra.mxu0 %v57
    %383 = vmatprep.subr.mxu0 0.0
    %384 = vmatpush1.msra.mxu0 %v58
    %385 = vmatprep.subr.mxu0 0.0
    %386 = vmatpush1.msra.mxu0 %v59
    %387 = vmatprep.subr.mxu0 0.0
    %388 = vmatpush1.msra.mxu0 0.0
    %389 = vmatprep.subr.mxu0 0.0
    %390 = vmatpush1.msra.mxu0 0.0
    %391 = vmatprep.subr.mxu0 0.0
    %392 = vmatpush1.msra.mxu0 0.0
    %393 = vmatprep.subr.mxu0 0.0
    %394 = vmatpush1.msra.mxu0 0.0
    %395 = vmatprep.subr.mxu0 0.0
    %396 = vmatpush1.msra.mxu0 0.0
    %397 = vmatprep.subr.mxu0 0.0
    %398 = vmatpush1.msra.mxu0 0.0
    %399 = vmatprep.subr.mxu0 0.0
    %400 = vmatpush1.msra.mxu0 0.0
    %401 = vmatprep.subr.mxu0 0.0
    %402 = vmatpush1.msra.mxu0 0.0
    %403 = vmatprep.subr.mxu0 0.0
    %404 = vmatpush1.msra.mxu0 0.0
    %405 = vmatprep.subr.mxu0 0.0
    %406 = vmatpush1.msra.mxu0 0.0
    %407 = vmatprep.subr.mxu0 0.0
    %408 = vmatpush1.msra.mxu0 0.0
    %409 = vmatprep.subr.mxu0 0.0
    %410 = vmatpush1.msra.mxu0 0.0
    %411 = vmatprep.subr.mxu0 0.0
    %412 = vmatpush1.msra.mxu0 0.0
    %413 = vmatprep.subr.mxu0 0.0
    %414 = vmatpush1.msra.mxu0 0.0
    %415 = vmatprep.subr.mxu0 0.0
    %416 = vmatpush1.msra.mxu0 0.0
    %417 = vmatprep.subr.mxu0 0.0
    %418 = vmatpush1.msra.mxu0 0.0
    %419 = vmatprep.subr.mxu0 0.0
    %420 = vmatpush1.msra.mxu0 0.0
    %421 = vmatprep.subr.mxu0 0.0
    %422 = vmatpush1.msra.mxu0 0.0
    %423 = vmatprep.subr.mxu0 0.0
    %424 = vmatpush1.msra.mxu0 0.0
    %425 = vmatprep.subr.mxu0 0.0
    %426 = vmatpush1.msra.mxu0 0.0
    %427 = vmatprep.subr.mxu0 0.0
    %428 = vmatpush1.msra.mxu0 0.0
    %429 = vmatprep.subr.mxu0 0.0
    %430 = vmatpush1.msra.mxu0 0.0
    %431 = vmatprep.subr.mxu0 0.0
    %432 = vmatpush1.msra.mxu0 0.0
    %433 = vmatprep.subr.mxu0 0.0
    %434 = vmatpush1.msra.mxu0 0.0
    %435 = vmatprep.subr.mxu0 0.0
    %436 = vmatpush1.msra.mxu0 0.0
    %437 = vmatprep.subr.mxu0 0.0
    %438 = vmatpush1.msra.mxu0 0.0
    %439 = vmatprep.subr.mxu0 0.0
    %440 = vmatpush1.msra.mxu0 0.0
    %441 = vmatprep.subr.mxu0 0.0
    %442 = vmatpush1.msra.mxu0 0.0
    %443 = vmatprep.mubr.f32.mxu0 0.0
    %444 = vmatmul.mubr.f32.gmra.mrb[0].mxu0 %v74
    %v445 = vpop.f32.mrb[0].mxu0
    %v446 = vadd.f32 0.0, %v445
    %v447 = vpop.f32.mrb[0].mxu0
    %448 = vmatprep.mubr.f32.mxu0 0.0
    %449 = vmatmul.mubr.f32.gmra.mrb[0].mxu0 %v77
    %v450 = vpop.f32.mrb[0].mxu0
    %v451 = vadd.f32 0.0, %v450
    %v452 = vpop.f32.mrb[0].mxu0
    %453 = vdwg.mxu0
    %454 = vmatprep.subr.mxu0 0.0
    %455 = vmatpush1.msra.mxu0 %v60
    %456 = vmatprep.subr.mxu0 0.0
    %457 = vmatpush1.msra.mxu0 %v61
    %458 = vmatprep.subr.mxu0 0.0
    %459 = vmatpush1.msra.mxu0 %v62
    %460 = vmatprep.subr.mxu0 0.0
    %461 = vmatpush1.msra.mxu0 %v63
    %462 = vmatprep.subr.mxu0 0.0
    %463 = vmatpush1.msra.mxu0 0.0
    %464 = vmatprep.subr.mxu0 0.0
    %465 = vmatpush1.msra.mxu0 0.0
    %466 = vmatprep.subr.mxu0 0.0
    %467 = vmatpush1.msra.mxu0 0.0
    %468 = vmatprep.subr.mxu0 0.0
    %469 = vmatpush1.msra.mxu0 0.0
    %470 = vmatprep.subr.mxu0 0.0
    %471 = vmatpush1.msra.mxu0 0.0
    %472 = vmatprep.subr.mxu0 0.0
    %473 = vmatpush1.msra.mxu0 0.0
    %474 = vmatprep.subr.mxu0 0.0
    %475 = vmatpush1.msra.mxu0 0.0
    %476 = vmatprep.subr.mxu0 0.0
    %477 = vmatpush1.msra.mxu0 0.0
    %478 = vmatprep.subr.mxu0 0.0
    %479 = vmatpush1.msra.mxu0 0.0
    %480 = vmatprep.subr.mxu0 0.0
    %481 = vmatpush1.msra.mxu0 0.0
    %482 = vmatprep.subr.mxu0 0.0
    %483 = vmatpush1.msra.mxu0 0.0
    %484 = vmatprep.subr.mxu0 0.0
    %485 = vmatpush1.msra.mxu0 0.0
    %486 = vmatprep.subr.mxu0 0.0
    %487 = vmatpush1.msra.mxu0 0.0
    %488 = vmatprep.subr.mxu0 0.0
    %489 = vmatpush1.msra.mxu0 0.0
    %490 = vmatprep.subr.mxu0 0.0
    %491 = vmatpush1.msra.mxu0 0.0
    %492 = vmatprep.subr.mxu0 0.0
    %493 = vmatpush1.msra.mxu0 0.0
    %494 = vmatprep.subr.mxu0 0.0
    %495 = vmatpush1.msra.mxu0 0.0
    %496 = vmatprep.subr.mxu0 0.0
    %497 = vmatpush1.msra.mxu0 0.0
    %498 = vmatprep.subr.mxu0 0.0
    %499 = vmatpush1.msra.mxu0 0.0
    %500 = vmatprep.subr.mxu0 0.0
    %501 = vmatpush1.msra.mxu0 0.0
    %502 = vmatprep.subr.mxu0 0.0
    %503 = vmatpush1.msra.mxu0 0.0
    %504 = vmatprep.subr.mxu0 0.0
    %505 = vmatpush1.msra.mxu0 0.0
    %506 = vmatprep.subr.mxu0 0.0
    %507 = vmatpush1.msra.mxu0 0.0
    %508 = vmatprep.subr.mxu0 0.0
    %509 = vmatpush1.msra.mxu0 0.0
    %510 = vmatprep.subr.mxu0 0.0
    %511 = vmatpush1.msra.mxu0 0.0
    %512 = vmatprep.subr.mxu0 0.0
    %513 = vmatpush1.msra.mxu0 0.0
    %514 = vmatprep.subr.mxu0 0.0
    %515 = vmatpush1.msra.mxu0 0.0
    %516 = vmatprep.subr.mxu0 0.0
    %517 = vmatpush1.msra.mxu0 0.0
    %518 = vmatprep.mubr.f32.mxu0 0.0
    %519 = vmatmul.mubr.f32.gmra.mrb[0].mxu0 %v74
    %v520 = vpop.f32.mrb[0].mxu0
    %v521 = vadd.f32 0.0, %v520
    %v522 = vpop.f32.mrb[0].mxu0
    %523 = vmatprep.mubr.f32.mxu0 0.0
    %524 = vmatmul.mubr.f32.gmra.mrb[0].mxu0 %v77
    %v525 = vpop.f32.mrb[0].mxu0
    %v526 = vadd.f32 0.0, %v525
    %v527 = vpop.f32.mrb[0].mxu0
    %528 = vdwg.mxu0
    %529 = vmatprep.subr.mxu0 0.0
    %530 = vmatpush1.msra.mxu0 %v64
    %531 = vmatprep.subr.mxu0 0.0
    %532 = vmatpush1.msra.mxu0 %v65
    %533 = vmatprep.subr.mxu0 0.0
    %534 = vmatpush1.msra.mxu0 %v66
    %535 = vmatprep.subr.mxu0 0.0
    %536 = vmatpush1.msra.mxu0 %v67
    %537 = vmatprep.subr.mxu0 0.0
    %538 = vmatpush1.msra.mxu0 0.0
    %539 = vmatprep.subr.mxu0 0.0
    %540 = vmatpush1.msra.mxu0 0.0
    %541 = vmatprep.subr.mxu0 0.0
    %542 = vmatpush1.msra.mxu0 0.0
    %543 = vmatprep.subr.mxu0 0.0
    %544 = vmatpush1.msra.mxu0 0.0
    %545 = vmatprep.subr.mxu0 0.0
    %546 = vmatpush1.msra.mxu0 0.0
    %547 = vmatprep.subr.mxu0 0.0
    %548 = vmatpush1.msra.mxu0 0.0
    %549 = vmatprep.subr.mxu0 0.0
    %550 = vmatpush1.msra.mxu0 0.0
    %551 = vmatprep.subr.mxu0 0.0
    %552 = vmatpush1.msra.mxu0 0.0
    %553 = vmatprep.subr.mxu0 0.0
    %554 = vmatpush1.msra.mxu0 0.0
    %555 = vmatprep.subr.mxu0 0.0
    %556 = vmatpush1.msra.mxu0 0.0
    %557 = vmatprep.subr.mxu0 0.0
    %558 = vmatpush1.msra.mxu0 0.0
    %559 = vmatprep.subr.mxu0 0.0
    %560 = vmatpush1.msra.mxu0 0.0
    %561 = vmatprep.subr.mxu0 0.0
    %562 = vmatpush1.msra.mxu0 0.0
    %563 = vmatprep.subr.mxu0 0.0
    %564 = vmatpush1.msra.mxu0 0.0
    %565 = vmatprep.subr.mxu0 0.0
    %566 = vmatpush1.msra.mxu0 0.0
    %567 = vmatprep.subr.mxu0 0.0
    %568 = vmatpush1.msra.mxu0 0.0
    %569 = vmatprep.subr.mxu0 0.0
    %570 = vmatpush1.msra.mxu0 0.0
    %571 = vmatprep.subr.mxu0 0.0
    %572 = vmatpush1.msra.mxu0 0.0
    %573 = vmatprep.subr.mxu0 0.0
    %574 = vmatpush1.msra.mxu0 0.0
    %575 = vmatprep.subr.mxu0 0.0
    %576 = vmatpush1.msra.mxu0 0.0
    %577 = vmatprep.subr.mxu0 0.0
    %578 = vmatpush1.msra.mxu0 0.0
    %579 = vmatprep.subr.mxu0 0.0
    %580 = vmatpush1.msra.mxu0 0.0
    %581 = vmatprep.subr.mxu0 0.0
    %582 = vmatpush1.msra.mxu0 0.0
    %583 = vmatprep.subr.mxu0 0.0
    %584 = vmatpush1.msra.mxu0 0.0
    %585 = vmatprep.subr.mxu0 0.0
    %586 = vmatpush1.msra.mxu0 0.0
    %587 = vmatprep.subr.mxu0 0.0
    %588 = vmatpush1.msra.mxu0 0.0
    %589 = vmatprep.subr.mxu0 0.0
    %590 = vmatpush1.msra.mxu0 0.0
    %591 = vmatprep.subr.mxu0 0.0
    %592 = vmatpush1.msra.mxu0 0.0
    %593 = vmatprep.mubr.f32.mxu0 0.0
    %594 = vmatmul.mubr.f32.gmra.mrb[0].mxu0 %v74
    %v595 = vpop.f32.mrb[0].mxu0
    %v596 = vadd.f32 0.0, %v595
    %v597 = vpop.f32.mrb[0].mxu0
    %598 = vmatprep.mubr.f32.mxu0 0.0
    %599 = vmatmul.mubr.f32.gmra.mrb[0].mxu0 %v77
    %v600 = vpop.f32.mrb[0].mxu0
    %v601 = vadd.f32 0.0, %v600
    %v602 = vpop.f32.mrb[0].mxu0
    %603 = vdwg.mxu0
    %604 = vmatprep.subr.mxu0 0.0
    %605 = vmatpush1.msra.mxu0 %v68
    %606 = vmatprep.subr.mxu0 0.0
    %607 = vmatpush1.msra.mxu0 %v69
    %608 = vmatprep.subr.mxu0 0.0
    %609 = vmatpush1.msra.mxu0 %v70
    %610 = vmatprep.subr.mxu0 0.0
    %611 = vmatpush1.msra.mxu0 %v71
    %612 = vmatprep.subr.mxu0 0.0
    %613 = vmatpush1.msra.mxu0 0.0
    %614 = vmatprep.subr.mxu0 0.0
    %615 = vmatpush1.msra.mxu0 0.0
    %616 = vmatprep.subr.mxu0 0.0
    %617 = vmatpush1.msra.mxu0 0.0
    %618 = vmatprep.subr.mxu0 0.0
    %619 = vmatpush1.msra.mxu0 0.0
    %620 = vmatprep.subr.mxu0 0.0
    %621 = vmatpush1.msra.mxu0 0.0
    %622 = vmatprep.subr.mxu0 0.0
    %623 = vmatpush1.msra.mxu0 0.0
    %624 = vmatprep.subr.mxu0 0.0
    %625 = vmatpush1.msra.mxu0 0.0
    %626 = vmatprep.subr.mxu0 0.0
    %627 = vmatpush1.msra.mxu0 0.0
    %628 = vmatprep.subr.mxu0 0.0
    %629 = vmatpush1.msra.mxu0 0.0
    %630 = vmatprep.subr.mxu0 0.0
    %631 = vmatpush1.msra.mxu0 0.0
    %632 = vmatprep.subr.mxu0 0.0
    %633 = vmatpush1.msra.mxu0 0.0
    %634 = vmatprep.subr.mxu0 0.0
    %635 = vmatpush1.msra.mxu0 0.0
    %636 = vmatprep.subr.mxu0 0.0
    %637 = vmatpush1.msra.mxu0 0.0
    %638 = vmatprep.subr.mxu0 0.0
    %639 = vmatpush1.msra.mxu0 0.0
    %640 = vmatprep.subr.mxu0 0.0
    %641 = vmatpush1.msra.mxu0 0.0
    %642 = vmatprep.subr.mxu0 0.0
    %643 = vmatpush1.msra.mxu0 0.0
    %644 = vmatprep.subr.mxu0 0.0
    %645 = vmatpush1.msra.mxu0 0.0
    %646 = vmatprep.subr.mxu0 0.0
    %647 = vmatpush1.msra.mxu0 0.0
    %648 = vmatprep.subr.mxu0 0.0
    %649 = vmatpush1.msra.mxu0 0.0
    %650 = vmatprep.subr.mxu0 0.0
    %651 = vmatpush1.msra.mxu0 0.0
    %652 = vmatprep.subr.mxu0 0.0
    %653 = vmatpush1.msra.mxu0 0.0
    %654 = vmatprep.subr.mxu0 0.0
    %655 = vmatpush1.msra.mxu0 0.0
    %656 = vmatprep.subr.mxu0 0.0
    %657 = vmatpush1.msra.mxu0 0.0
    %658 = vmatprep.subr.mxu0 0.0
    %659 = vmatpush1.msra.mxu0 0.0
    %660 = vmatprep.subr.mxu0 0.0
    %661 = vmatpush1.msra.mxu0 0.0
    %662 = vmatprep.subr.mxu0 0.0
    %663 = vmatpush1.msra.mxu0 0.0
    %664 = vmatprep.subr.mxu0 0.0
    %665 = vmatpush1.msra.mxu0 0.0
    %666 = vmatprep.subr.mxu0 0.0
    %667 = vmatpush1.msra.mxu0 0.0
    %668 = vmatprep.mubr.f32.mxu0 0.0
    %669 = vmatmul.mubr.f32.gmra.mrb[0].mxu0 %v74
    %v670 = vpop.f32.mrb[0].mxu0
    %v671 = vadd.f32 0.0, %v670
    %v672 = vpop.f32.mrb[0].mxu0
    %673 = vmatprep.mubr.f32.mxu0 0.0
    %674 = vmatmul.mubr.f32.gmra.mrb[0].mxu0 %v77
    %v675 = vpop.f32.mrb[0].mxu0
    %v676 = vadd.f32 0.0, %v675
    %v677 = vpop.f32.mrb[0].mxu0
    %678 = vdwg.mxu0
    %v680 = vsel %vm72, %v146, 0
    %682 = vmatprep.subr.mxu0 0.0
    %683 = vmatpush1.xpose.msra.mxu0 %v74
    %684 = vmatprep.subr.mxu0 0.0
    %685 = vmatpush1.xpose.msra.mxu0 0.0
    %686 = vmatprep.subr.mxu0 0.0
    %687 = vmatpush1.xpose.msra.mxu0 0.0
    %688 = vmatprep.subr.mxu0 0.0
    %689 = vmatpush1.xpose.msra.mxu0 0.0
    %690 = vmatprep.subr.mxu0 0.0
    %691 = vmatpush1.xpose.msra.mxu0 0.0
    %692 = vmatprep.subr.mxu0 0.0
    %693 = vmatpush1.xpose.msra.mxu0 0.0
    %694 = vmatprep.subr.mxu0 0.0
    %695 = vmatpush1.xpose.msra.mxu0 0.0
    %696 = vmatprep.subr.mxu0 0.0
    %697 = vmatpush1.xpose.msra.mxu0 0.0
    %698 = vmatprep.subr.mxu0 0.0
    %699 = vmatpush1.xpose.msra.mxu0 0.0
    %700 = vmatprep.subr.mxu0 0.0
    %701 = vmatpush1.xpose.msra.mxu0 0.0
    %702 = vmatprep.subr.mxu0 0.0
    %703 = vmatpush1.xpose.msra.mxu0 0.0
    %704 = vmatprep.subr.mxu0 0.0
    %705 = vmatpush1.xpose.msra.mxu0 0.0
    %706 = vmatprep.subr.mxu0 0.0
    %707 = vmatpush1.xpose.msra.mxu0 0.0
    %708 = vmatprep.subr.mxu0 0.0
    %709 = vmatpush1.xpose.msra.mxu0 0.0
    %710 = vmatprep.subr.mxu0 0.0
    %711 = vmatpush1.xpose.msra.mxu0 0.0
    %712 = vmatprep.subr.mxu0 0.0
    %713 = vmatpush1.xpose.msra.mxu0 0.0
    %714 = vmatprep.subr.mxu0 0.0
    %715 = vmatpush1.xpose.msra.mxu0 0.0
    %716 = vmatprep.subr.mxu0 0.0
    %717 = vmatpush1.xpose.msra.mxu0 0.0
    %718 = vmatprep.subr.mxu0 0.0
    %719 = vmatpush1.xpose.msra.mxu0 0.0
    %720 = vmatprep.subr.mxu0 0.0
    %721 = vmatpush1.xpose.msra.mxu0 0.0
    %722 = vmatprep.subr.mxu0 0.0
    %723 = vmatpush1.xpose.msra.mxu0 0.0
    %724 = vmatprep.subr.mxu0 0.0
    %725 = vmatpush1.xpose.msra.mxu0 0.0
    %726 = vmatprep.subr.mxu0 0.0
    %727 = vmatpush1.xpose.msra.mxu0 0.0
    %728 = vmatprep.subr.mxu0 0.0
    %729 = vmatpush1.xpose.msra.mxu0 0.0
    %730 = vmatprep.subr.mxu0 0.0
    %731 = vmatpush1.xpose.msra.mxu0 0.0
    %732 = vmatprep.subr.mxu0 0.0
    %733 = vmatpush1.xpose.msra.mxu0 0.0
    %734 = vmatprep.subr.mxu0 0.0
    %735 = vmatpush1.xpose.msra.mxu0 0.0
    %736 = vmatprep.subr.mxu0 0.0
    %737 = vmatpush1.xpose.msra.mxu0 0.0
    %738 = vmatprep.subr.mxu0 0.0
    %739 = vmatpush1.xpose.msra.mxu0 0.0
    %740 = vmatprep.subr.mxu0 0.0
    %741 = vmatpush1.xpose.msra.mxu0 0.0
    %742 = vmatprep.subr.mxu0 0.0
    %743 = vmatpush1.xpose.msra.mxu0 0.0
    %744 = vmatprep.subr.mxu0 0.0
    %745 = vmatpush1.xpose.msra.mxu0 0.0
    %746 = vmatprep.mubr.f32.mxu0 0.0
    %747 = vmatmul.mubr.f32.gmra.mrb[0].mxu0 %v680
    %v748 = vpop.f32.mrb[0].mxu0
    %v749 = vadd.f32 0.0, %v748
    %v750 = vpop.f32.mrb[0].mxu0
    %751 = vdwg.mxu0
    %v753 = vsel %vm72, %v151, 0
    %755 = vmatprep.subr.mxu0 0.0
    %756 = vmatpush1.xpose.msra.mxu0 %v77
    %757 = vmatprep.subr.mxu0 0.0
    %758 = vmatpush1.xpose.msra.mxu0 0.0
    %759 = vmatprep.subr.mxu0 0.0
    %760 = vmatpush1.xpose.msra.mxu0 0.0
    %761 = vmatprep.subr.mxu0 0.0
    %762 = vmatpush1.xpose.msra.mxu0 0.0
    %763 = vmatprep.subr.mxu0 0.0
    %764 = vmatpush1.xpose.msra.mxu0 0.0
    %765 = vmatprep.subr.mxu0 0.0
    %766 = vmatpush1.xpose.msra.mxu0 0.0
    %767 = vmatprep.subr.mxu0 0.0
    %768 = vmatpush1.xpose.msra.mxu0 0.0
    %769 = vmatprep.subr.mxu0 0.0
    %770 = vmatpush1.xpose.msra.mxu0 0.0
    %771 = vmatprep.subr.mxu0 0.0
    %772 = vmatpush1.xpose.msra.mxu0 0.0
    %773 = vmatprep.subr.mxu0 0.0
    %774 = vmatpush1.xpose.msra.mxu0 0.0
    %775 = vmatprep.subr.mxu0 0.0
    %776 = vmatpush1.xpose.msra.mxu0 0.0
    %777 = vmatprep.subr.mxu0 0.0
    %778 = vmatpush1.xpose.msra.mxu0 0.0
    %779 = vmatprep.subr.mxu0 0.0
    %780 = vmatpush1.xpose.msra.mxu0 0.0
    %781 = vmatprep.subr.mxu0 0.0
    %782 = vmatpush1.xpose.msra.mxu0 0.0
    %783 = vmatprep.subr.mxu0 0.0
    %784 = vmatpush1.xpose.msra.mxu0 0.0
    %785 = vmatprep.subr.mxu0 0.0
    %786 = vmatpush1.xpose.msra.mxu0 0.0
    %787 = vmatprep.subr.mxu0 0.0
    %788 = vmatpush1.xpose.msra.mxu0 0.0
    %789 = vmatprep.subr.mxu0 0.0
    %790 = vmatpush1.xpose.msra.mxu0 0.0
    %791 = vmatprep.subr.mxu0 0.0
    %792 = vmatpush1.xpose.msra.mxu0 0.0
    %793 = vmatprep.subr.mxu0 0.0
    %794 = vmatpush1.xpose.msra.mxu0 0.0
    %795 = vmatprep.subr.mxu0 0.0
    %796 = vmatpush1.xpose.msra.mxu0 0.0
    %797 = vmatprep.subr.mxu0 0.0
    %798 = vmatpush1.xpose.msra.mxu0 0.0
    %799 = vmatprep.subr.mxu0 0.0
    %800 = vmatpush1.xpose.msra.mxu0 0.0
    %801 = vmatprep.subr.mxu0 0.0
    %802 = vmatpush1.xpose.msra.mxu0 0.0
    %803 = vmatprep.subr.mxu0 0.0
    %804 = vmatpush1.xpose.msra.mxu0 0.0
    %805 = vmatprep.subr.mxu0 0.0
    %806 = vmatpush1.xpose.msra.mxu0 0.0
    %807 = vmatprep.subr.mxu0 0.0
    %808 = vmatpush1.xpose.msra.mxu0 0.0
    %809 = vmatprep.subr.mxu0 0.0
    %810 = vmatpush1.xpose.msra.mxu0 0.0
    %811 = vmatprep.subr.mxu0 0.0
    %812 = vmatpush1.xpose.msra.mxu0 0.0
    %813 = vmatprep.subr.mxu0 0.0
    %814 = vmatpush1.xpose.msra.mxu0 0.0
    %815 = vmatprep.subr.mxu0 0.0
    %816 = vmatpush1.xpose.msra.mxu0 0.0
    %817 = vmatprep.subr.mxu0 0.0
    %818 = vmatpush1.xpose.msra.mxu0 0.0
    %819 = vmatprep.mubr.f32.mxu0 0.0
    %820 = vmatmul.mubr.f32.gmra.mrb[0].mxu0 %v753
    %v821 = vpop.f32.mrb[0].mxu0
    %v822 = vadd.f32 0.0, %v821
    %v823 = vpop.f32.mrb[0].mxu0
    %824 = vdwg.mxu0
    %v826 = vsel %vm72, %v221, 0
    %828 = vmatprep.subr.mxu0 0.0
    %829 = vmatpush1.xpose.msra.mxu0 %v74
    %830 = vmatprep.subr.mxu0 0.0
    %831 = vmatpush1.xpose.msra.mxu0 0.0
    %832 = vmatprep.subr.mxu0 0.0
    %833 = vmatpush1.xpose.msra.mxu0 0.0
    %834 = vmatprep.subr.mxu0 0.0
    %835 = vmatpush1.xpose.msra.mxu0 0.0
    %836 = vmatprep.subr.mxu0 0.0
    %837 = vmatpush1.xpose.msra.mxu0 0.0
    %838 = vmatprep.subr.mxu0 0.0
    %839 = vmatpush1.xpose.msra.mxu0 0.0
    %840 = vmatprep.subr.mxu0 0.0
    %841 = vmatpush1.xpose.msra.mxu0 0.0
    %842 = vmatprep.subr.mxu0 0.0
    %843 = vmatpush1.xpose.msra.mxu0 0.0
    %844 = vmatprep.subr.mxu0 0.0
    %845 = vmatpush1.xpose.msra.mxu0 0.0
    %846 = vmatprep.subr.mxu0 0.0
    %847 = vmatpush1.xpose.msra.mxu0 0.0
    %848 = vmatprep.subr.mxu0 0.0
    %849 = vmatpush1.xpose.msra.mxu0 0.0
    %850 = vmatprep.subr.mxu0 0.0
    %851 = vmatpush1.xpose.msra.mxu0 0.0
    %852 = vmatprep.subr.mxu0 0.0
    %853 = vmatpush1.xpose.msra.mxu0 0.0
    %854 = vmatprep.subr.mxu0 0.0
    %855 = vmatpush1.xpose.msra.mxu0 0.0
    %856 = vmatprep.subr.mxu0 0.0
    %857 = vmatpush1.xpose.msra.mxu0 0.0
    %858 = vmatprep.subr.mxu0 0.0
    %859 = vmatpush1.xpose.msra.mxu0 0.0
    %860 = vmatprep.subr.mxu0 0.0
    %861 = vmatpush1.xpose.msra.mxu0 0.0
    %862 = vmatprep.subr.mxu0 0.0
    %863 = vmatpush1.xpose.msra.mxu0 0.0
    %864 = vmatprep.subr.mxu0 0.0
    %865 = vmatpush1.xpose.msra.mxu0 0.0
    %866 = vmatprep.subr.mxu0 0.0
    %867 = vmatpush1.xpose.msra.mxu0 0.0
    %868 = vmatprep.subr.mxu0 0.0
    %869 = vmatpush1.xpose.msra.mxu0 0.0
    %870 = vmatprep.subr.mxu0 0.0
    %871 = vmatpush1.xpose.msra.mxu0 0.0
    %872 = vmatprep.subr.mxu0 0.0
    %873 = vmatpush1.xpose.msra.mxu0 0.0
    %874 = vmatprep.subr.mxu0 0.0
    %875 = vmatpush1.xpose.msra.mxu0 0.0
    %876 = vmatprep.subr.mxu0 0.0
    %877 = vmatpush1.xpose.msra.mxu0 0.0
    %878 = vmatprep.subr.mxu0 0.0
    %879 = vmatpush1.xpose.msra.mxu0 0.0
    %880 = vmatprep.subr.mxu0 0.0
    %881 = vmatpush1.xpose.msra.mxu0 0.0
    %882 = vmatprep.subr.mxu0 0.0
    %883 = vmatpush1.xpose.msra.mxu0 0.0
    %884 = vmatprep.subr.mxu0 0.0
    %885 = vmatpush1.xpose.msra.mxu0 0.0
    %886 = vmatprep.subr.mxu0 0.0
    %887 = vmatpush1.xpose.msra.mxu0 0.0
    %888 = vmatprep.subr.mxu0 0.0
    %889 = vmatpush1.xpose.msra.mxu0 0.0
    %890 = vmatprep.subr.mxu0 0.0
    %891 = vmatpush1.xpose.msra.mxu0 0.0
    %892 = vmatprep.mubr.f32.mxu0 0.0
    %893 = vmatmul.mubr.f32.gmra.mrb[0].mxu0 %v826
    %v894 = vpop.f32.mrb[0].mxu0
    %v895 = vadd.f32 0.0, %v894
    %v896 = vpop.f32.mrb[0].mxu0
    %897 = vdwg.mxu0
    %v899 = vsel %vm72, %v226, 0
    %901 = vmatprep.subr.mxu0 0.0
    %902 = vmatpush1.xpose.msra.mxu0 %v77
    %903 = vmatprep.subr.mxu0 0.0
    %904 = vmatpush1.xpose.msra.mxu0 0.0
    %905 = vmatprep.subr.mxu0 0.0
    %906 = vmatpush1.xpose.msra.mxu0 0.0
    %907 = vmatprep.subr.mxu0 0.0
    %908 = vmatpush1.xpose.msra.mxu0 0.0
    %909 = vmatprep.subr.mxu0 0.0
    %910 = vmatpush1.xpose.msra.mxu0 0.0
    %911 = vmatprep.subr.mxu0 0.0
    %912 = vmatpush1.xpose.msra.mxu0 0.0
    %913 = vmatprep.subr.mxu0 0.0
    %914 = vmatpush1.xpose.msra.mxu0 0.0
    %915 = vmatprep.subr.mxu0 0.0
    %916 = vmatpush1.xpose.msra.mxu0 0.0
    %917 = vmatprep.subr.mxu0 0.0
    %918 = vmatpush1.xpose.msra.mxu0 0.0
    %919 = vmatprep.subr.mxu0 0.0
    %920 = vmatpush1.xpose.msra.mxu0 0.0
    %921 = vmatprep.subr.mxu0 0.0
    %922 = vmatpush1.xpose.msra.mxu0 0.0
    %923 = vmatprep.subr.mxu0 0.0
    %924 = vmatpush1.xpose.msra.mxu0 0.0
    %925 = vmatprep.subr.mxu0 0.0
    %926 = vmatpush1.xpose.msra.mxu0 0.0
    %927 = vmatprep.subr.mxu0 0.0
    %928 = vmatpush1.xpose.msra.mxu0 0.0
    %929 = vmatprep.subr.mxu0 0.0
    %930 = vmatpush1.xpose.msra.mxu0 0.0
    %931 = vmatprep.subr.mxu0 0.0
    %932 = vmatpush1.xpose.msra.mxu0 0.0
    %933 = vmatprep.subr.mxu0 0.0
    %934 = vmatpush1.xpose.msra.mxu0 0.0
    %935 = vmatprep.subr.mxu0 0.0
    %936 = vmatpush1.xpose.msra.mxu0 0.0
    %937 = vmatprep.subr.mxu0 0.0
    %938 = vmatpush1.xpose.msra.mxu0 0.0
    %939 = vmatprep.subr.mxu0 0.0
    %940 = vmatpush1.xpose.msra.mxu0 0.0
    %941 = vmatprep.subr.mxu0 0.0
    %942 = vmatpush1.xpose.msra.mxu0 0.0
    %943 = vmatprep.subr.mxu0 0.0
    %944 = vmatpush1.xpose.msra.mxu0 0.0
    %945 = vmatprep.subr.mxu0 0.0
    %946 = vmatpush1.xpose.msra.mxu0 0.0
    %947 = vmatprep.subr.mxu0 0.0
    %948 = vmatpush1.xpose.msra.mxu0 0.0
    %949 = vmatprep.subr.mxu0 0.0
    %950 = vmatpush1.xpose.msra.mxu0 0.0
    %951 = vmatprep.subr.mxu0 0.0
    %952 = vmatpush1.xpose.msra.mxu0 0.0
    %953 = vmatprep.subr.mxu0 0.0
    %954 = vmatpush1.xpose.msra.mxu0 0.0
    %955 = vmatprep.subr.mxu0 0.0
    %956 = vmatpush1.xpose.msra.mxu0 0.0
    %957 = vmatprep.subr.mxu0 0.0
    %958 = vmatpush1.xpose.msra.mxu0 0.0
    %959 = vmatprep.subr.mxu0 0.0
    %960 = vmatpush1.xpose.msra.mxu0 0.0
    %961 = vmatprep.subr.mxu0 0.0
    %962 = vmatpush1.xpose.msra.mxu0 0.0
    %963 = vmatprep.subr.mxu0 0.0
    %964 = vmatpush1.xpose.msra.mxu0 0.0
    %965 = vmatprep.mubr.f32.mxu0 0.0
    %966 = vmatmul.mubr.f32.gmra.mrb[0].mxu0 %v899
    %v967 = vpop.f32.mrb[0].mxu0
    %v968 = vadd.f32 0.0, %v967
    %v969 = vpop.f32.mrb[0].mxu0
    %970 = vdwg.mxu0
    %v972 = vsel %vm72, %v296, 0
    %974 = vmatprep.subr.mxu0 0.0
    %975 = vmatpush1.xpose.msra.mxu0 %v74
    %976 = vmatprep.subr.mxu0 0.0
    %977 = vmatpush1.xpose.msra.mxu0 0.0
    %978 = vmatprep.subr.mxu0 0.0
    %979 = vmatpush1.xpose.msra.mxu0 0.0
    %980 = vmatprep.subr.mxu0 0.0
    %981 = vmatpush1.xpose.msra.mxu0 0.0
    %982 = vmatprep.subr.mxu0 0.0
    %983 = vmatpush1.xpose.msra.mxu0 0.0
    %984 = vmatprep.subr.mxu0 0.0
    %985 = vmatpush1.xpose.msra.mxu0 0.0
    %986 = vmatprep.subr.mxu0 0.0
    %987 = vmatpush1.xpose.msra.mxu0 0.0
    %988 = vmatprep.subr.mxu0 0.0
    %989 = vmatpush1.xpose.msra.mxu0 0.0
    %990 = vmatprep.subr.mxu0 0.0
    %991 = vmatpush1.xpose.msra.mxu0 0.0
    %992 = vmatprep.subr.mxu0 0.0
    %993 = vmatpush1.xpose.msra.mxu0 0.0
    %994 = vmatprep.subr.mxu0 0.0
    %995 = vmatpush1.xpose.msra.mxu0 0.0
    %996 = vmatprep.subr.mxu0 0.0
    %997 = vmatpush1.xpose.msra.mxu0 0.0
    %998 = vmatprep.subr.mxu0 0.0
    %999 = vmatpush1.xpose.msra.mxu0 0.0
    %1000 = vmatprep.subr.mxu0 0.0
    %1001 = vmatpush1.xpose.msra.mxu0 0.0
    %1002 = vmatprep.subr.mxu0 0.0
    %1003 = vmatpush1.xpose.msra.mxu0 0.0
    %1004 = vmatprep.subr.mxu0 0.0
    %1005 = vmatpush1.xpose.msra.mxu0 0.0
    %1006 = vmatprep.subr.mxu0 0.0
    %1007 = vmatpush1.xpose.msra.mxu0 0.0
    %1008 = vmatprep.subr.mxu0 0.0
    %1009 = vmatpush1.xpose.msra.mxu0 0.0
    %1010 = vmatprep.subr.mxu0 0.0
    %1011 = vmatpush1.xpose.msra.mxu0 0.0
    %1012 = vmatprep.subr.mxu0 0.0
    %1013 = vmatpush1.xpose.msra.mxu0 0.0
    %1014 = vmatprep.subr.mxu0 0.0
    %1015 = vmatpush1.xpose.msra.mxu0 0.0
    %1016 = vmatprep.subr.mxu0 0.0
    %1017 = vmatpush1.xpose.msra.mxu0 0.0
    %1018 = vmatprep.subr.mxu0 0.0
    %1019 = vmatpush1.xpose.msra.mxu0 0.0
    %1020 = vmatprep.subr.mxu0 0.0
    %1021 = vmatpush1.xpose.msra.mxu0 0.0
    %1022 = vmatprep.subr.mxu0 0.0
    %1023 = vmatpush1.xpose.msra.mxu0 0.0
    %1024 = vmatprep.subr.mxu0 0.0
    %1025 = vmatpush1.xpose.msra.mxu0 0.0
    %1026 = vmatprep.subr.mxu0 0.0
    %1027 = vmatpush1.xpose.msra.mxu0 0.0
    %1028 = vmatprep.subr.mxu0 0.0
    %1029 = vmatpush1.xpose.msra.mxu0 0.0
    %1030 = vmatprep.subr.mxu0 0.0
    %1031 = vmatpush1.xpose.msra.mxu0 0.0
    %1032 = vmatprep.subr.mxu0 0.0
    %1033 = vmatpush1.xpose.msra.mxu0 0.0
    %1034 = vmatprep.subr.mxu0 0.0
    %1035 = vmatpush1.xpose.msra.mxu0 0.0
    %1036 = vmatprep.subr.mxu0 0.0
    %1037 = vmatpush1.xpose.msra.mxu0 0.0
    %1038 = vmatprep.mubr.f32.mxu0 0.0
    %1039 = vmatmul.mubr.f32.gmra.mrb[0].mxu0 %v972
    %v1040 = vpop.f32.mrb[0].mxu0
    %v1041 = vadd.f32 0.0, %v1040
    %v1042 = vpop.f32.mrb[0].mxu0
    %1043 = vdwg.mxu0
    %v1045 = vsel %vm72, %v301, 0
    %1047 = vmatprep.subr.mxu0 0.0
    %1048 = vmatpush1.xpose.msra.mxu0 %v77
    %1049 = vmatprep.subr.mxu0 0.0
    %1050 = vmatpush1.xpose.msra.mxu0 0.0
    %1051 = vmatprep.subr.mxu0 0.0
    %1052 = vmatpush1.xpose.msra.mxu0 0.0
    %1053 = vmatprep.subr.mxu0 0.0
    %1054 = vmatpush1.xpose.msra.mxu0 0.0
    %1055 = vmatprep.subr.mxu0 0.0
    %1056 = vmatpush1.xpose.msra.mxu0 0.0
    %1057 = vmatprep.subr.mxu0 0.0
    %1058 = vmatpush1.xpose.msra.mxu0 0.0
    %1059 = vmatprep.subr.mxu0 0.0
    %1060 = vmatpush1.xpose.msra.mxu0 0.0
    %1061 = vmatprep.subr.mxu0 0.0
    %1062 = vmatpush1.xpose.msra.mxu0 0.0
    %1063 = vmatprep.subr.mxu0 0.0
    %1064 = vmatpush1.xpose.msra.mxu0 0.0
    %1065 = vmatprep.subr.mxu0 0.0
    %1066 = vmatpush1.xpose.msra.mxu0 0.0
    %1067 = vmatprep.subr.mxu0 0.0
    %1068 = vmatpush1.xpose.msra.mxu0 0.0
    %1069 = vmatprep.subr.mxu0 0.0
    %1070 = vmatpush1.xpose.msra.mxu0 0.0
    %1071 = vmatprep.subr.mxu0 0.0
    %1072 = vmatpush1.xpose.msra.mxu0 0.0
    %1073 = vmatprep.subr.mxu0 0.0
    %1074 = vmatpush1.xpose.msra.mxu0 0.0
    %1075 = vmatprep.subr.mxu0 0.0
    %1076 = vmatpush1.xpose.msra.mxu0 0.0
    %1077 = vmatprep.subr.mxu0 0.0
    %1078 = vmatpush1.xpose.msra.mxu0 0.0
    %1079 = vmatprep.subr.mxu0 0.0
    %1080 = vmatpush1.xpose.msra.mxu0 0.0
    %1081 = vmatprep.subr.mxu0 0.0
    %1082 = vmatpush1.xpose.msra.mxu0 0.0
    %1083 = vmatprep.subr.mxu0 0.0
    %1084 = vmatpush1.xpose.msra.mxu0 0.0
    %1085 = vmatprep.subr.mxu0 0.0
    %1086 = vmatpush1.xpose.msra.mxu0 0.0
    %1087 = vmatprep.subr.mxu0 0.0
    %1088 = vmatpush1.xpose.msra.mxu0 0.0
    %1089 = vmatprep.subr.mxu0 0.0
    %1090 = vmatpush1.xpose.msra.mxu0 0.0
    %1091 = vmatprep.subr.mxu0 0.0
    %1092 = vmatpush1.xpose.msra.mxu0 0.0
    %1093 = vmatprep.subr.mxu0 0.0
    %1094 = vmatpush1.xpose.msra.mxu0 0.0
    %1095 = vmatprep.subr.mxu0 0.0
    %1096 = vmatpush1.xpose.msra.mxu0 0.0
    %1097 = vmatprep.subr.mxu0 0.0
    %1098 = vmatpush1.xpose.msra.mxu0 0.0
    %1099 = vmatprep.subr.mxu0 0.0
    %1100 = vmatpush1.xpose.msra.mxu0 0.0
    %1101 = vmatprep.subr.mxu0 0.0
    %1102 = vmatpush1.xpose.msra.mxu0 0.0
    %1103 = vmatprep.subr.mxu0 0.0
    %1104 = vmatpush1.xpose.msra.mxu0 0.0
    %1105 = vmatprep.subr.mxu0 0.0
    %1106 = vmatpush1.xpose.msra.mxu0 0.0
    %1107 = vmatprep.subr.mxu0 0.0
    %1108 = vmatpush1.xpose.msra.mxu0 0.0
    %1109 = vmatprep.subr.mxu0 0.0
    %1110 = vmatpush1.xpose.msra.mxu0 0.0
    %1111 = vmatprep.mubr.f32.mxu0 0.0
    %1112 = vmatmul.mubr.f32.gmra.mrb[0].mxu0 %v1045
    %v1113 = vpop.f32.mrb[0].mxu0
    %v1114 = vadd.f32 0.0, %v1113
    %v1115 = vpop.f32.mrb[0].mxu0
    %1116 = vdwg.mxu0
    %v1118 = vsel %vm72, %v371, 0
    %1120 = vmatprep.subr.mxu0 0.0
    %1121 = vmatpush1.xpose.msra.mxu0 %v74
    %1122 = vmatprep.subr.mxu0 0.0
    %1123 = vmatpush1.xpose.msra.mxu0 0.0
    %1124 = vmatprep.subr.mxu0 0.0
    %1125 = vmatpush1.xpose.msra.mxu0 0.0
    %1126 = vmatprep.subr.mxu0 0.0
    %1127 = vmatpush1.xpose.msra.mxu0 0.0
    %1128 = vmatprep.subr.mxu0 0.0
    %1129 = vmatpush1.xpose.msra.mxu0 0.0
    %1130 = vmatprep.subr.mxu0 0.0
    %1131 = vmatpush1.xpose.msra.mxu0 0.0
    %1132 = vmatprep.subr.mxu0 0.0
    %1133 = vmatpush1.xpose.msra.mxu0 0.0
    %1134 = vmatprep.subr.mxu0 0.0
    %1135 = vmatpush1.xpose.msra.mxu0 0.0
    %1136 = vmatprep.subr.mxu0 0.0
    %1137 = vmatpush1.xpose.msra.mxu0 0.0
    %1138 = vmatprep.subr.mxu0 0.0
    %1139 = vmatpush1.xpose.msra.mxu0 0.0
    %1140 = vmatprep.subr.mxu0 0.0
    %1141 = vmatpush1.xpose.msra.mxu0 0.0
    %1142 = vmatprep.subr.mxu0 0.0
    %1143 = vmatpush1.xpose.msra.mxu0 0.0
    %1144 = vmatprep.subr.mxu0 0.0
    %1145 = vmatpush1.xpose.msra.mxu0 0.0
    %1146 = vmatprep.subr.mxu0 0.0
    %1147 = vmatpush1.xpose.msra.mxu0 0.0
    %1148 = vmatprep.subr.mxu0 0.0
    %1149 = vmatpush1.xpose.msra.mxu0 0.0
    %1150 = vmatprep.subr.mxu0 0.0
    %1151 = vmatpush1.xpose.msra.mxu0 0.0
    %1152 = vmatprep.subr.mxu0 0.0
    %1153 = vmatpush1.xpose.msra.mxu0 0.0
    %1154 = vmatprep.subr.mxu0 0.0
    %1155 = vmatpush1.xpose.msra.mxu0 0.0
    %1156 = vmatprep.subr.mxu0 0.0
    %1157 = vmatpush1.xpose.msra.mxu0 0.0
    %1158 = vmatprep.subr.mxu0 0.0
    %1159 = vmatpush1.xpose.msra.mxu0 0.0
    %1160 = vmatprep.subr.mxu0 0.0
    %1161 = vmatpush1.xpose.msra.mxu0 0.0
    %1162 = vmatprep.subr.mxu0 0.0
    %1163 = vmatpush1.xpose.msra.mxu0 0.0
    %1164 = vmatprep.subr.mxu0 0.0
    %1165 = vmatpush1.xpose.msra.mxu0 0.0
    %1166 = vmatprep.subr.mxu0 0.0
    %1167 = vmatpush1.xpose.msra.mxu0 0.0
    %1168 = vmatprep.subr.mxu0 0.0
    %1169 = vmatpush1.xpose.msra.mxu0 0.0
    %1170 = vmatprep.subr.mxu0 0.0
    %1171 = vmatpush1.xpose.msra.mxu0 0.0
    %1172 = vmatprep.subr.mxu0 0.0
    %1173 = vmatpush1.xpose.msra.mxu0 0.0
    %1174 = vmatprep.subr.mxu0 0.0
    %1175 = vmatpush1.xpose.msra.mxu0 0.0
    %1176 = vmatprep.subr.mxu0 0.0
    %1177 = vmatpush1.xpose.msra.mxu0 0.0
    %1178 = vmatprep.subr.mxu0 0.0
    %1179 = vmatpush1.xpose.msra.mxu0 0.0
    %1180 = vmatprep.subr.mxu0 0.0
    %1181 = vmatpush1.xpose.msra.mxu0 0.0
    %1182 = vmatprep.subr.mxu0 0.0
    %1183 = vmatpush1.xpose.msra.mxu0 0.0
    %1184 = vmatprep.mubr.f32.mxu0 0.0
    %1185 = vmatmul.mubr.f32.gmra.mrb[0].mxu0 %v1118
    %v1186 = vpop.f32.mrb[0].mxu0
    %v1187 = vadd.f32 0.0, %v1186
    %v1188 = vpop.f32.mrb[0].mxu0
    %1189 = vdwg.mxu0
    %v1191 = vsel %vm72, %v376, 0
    %1193 = vmatprep.subr.mxu0 0.0
    %1194 = vmatpush1.xpose.msra.mxu0 %v77
    %1195 = vmatprep.subr.mxu0 0.0
    %1196 = vmatpush1.xpose.msra.mxu0 0.0
    %1197 = vmatprep.subr.mxu0 0.0
    %1198 = vmatpush1.xpose.msra.mxu0 0.0
    %1199 = vmatprep.subr.mxu0 0.0
    %1200 = vmatpush1.xpose.msra.mxu0 0.0
    %1201 = vmatprep.subr.mxu0 0.0
    %1202 = vmatpush1.xpose.msra.mxu0 0.0
    %1203 = vmatprep.subr.mxu0 0.0
    %1204 = vmatpush1.xpose.msra.mxu0 0.0
    %1205 = vmatprep.subr.mxu0 0.0
    %1206 = vmatpush1.xpose.msra.mxu0 0.0
    %1207 = vmatprep.subr.mxu0 0.0
    %1208 = vmatpush1.xpose.msra.mxu0 0.0
    %1209 = vmatprep.subr.mxu0 0.0
    %1210 = vmatpush1.xpose.msra.mxu0 0.0
    %1211 = vmatprep.subr.mxu0 0.0
    %1212 = vmatpush1.xpose.msra.mxu0 0.0
    %1213 = vmatprep.subr.mxu0 0.0
    %1214 = vmatpush1.xpose.msra.mxu0 0.0
    %1215 = vmatprep.subr.mxu0 0.0
    %1216 = vmatpush1.xpose.msra.mxu0 0.0
    %1217 = vmatprep.subr.mxu0 0.0
    %1218 = vmatpush1.xpose.msra.mxu0 0.0
    %1219 = vmatprep.subr.mxu0 0.0
    %1220 = vmatpush1.xpose.msra.mxu0 0.0
    %1221 = vmatprep.subr.mxu0 0.0
    %1222 = vmatpush1.xpose.msra.mxu0 0.0
    %1223 = vmatprep.subr.mxu0 0.0
    %1224 = vmatpush1.xpose.msra.mxu0 0.0
    %1225 = vmatprep.subr.mxu0 0.0
    %1226 = vmatpush1.xpose.msra.mxu0 0.0
    %1227 = vmatprep.subr.mxu0 0.0
    %1228 = vmatpush1.xpose.msra.mxu0 0.0
    %1229 = vmatprep.subr.mxu0 0.0
    %1230 = vmatpush1.xpose.msra.mxu0 0.0
    %1231 = vmatprep.subr.mxu0 0.0
    %1232 = vmatpush1.xpose.msra.mxu0 0.0
    %1233 = vmatprep.subr.mxu0 0.0
    %1234 = vmatpush1.xpose.msra.mxu0 0.0
    %1235 = vmatprep.subr.mxu0 0.0
    %1236 = vmatpush1.xpose.msra.mxu0 0.0
    %1237 = vmatprep.subr.mxu0 0.0
    %1238 = vmatpush1.xpose.msra.mxu0 0.0
    %1239 = vmatprep.subr.mxu0 0.0
    %1240 = vmatpush1.xpose.msra.mxu0 0.0
    %1241 = vmatprep.subr.mxu0 0.0
    %1242 = vmatpush1.xpose.msra.mxu0 0.0
    %1243 = vmatprep.subr.mxu0 0.0
    %1244 = vmatpush1.xpose.msra.mxu0 0.0
    %1245 = vmatprep.subr.mxu0 0.0
    %1246 = vmatpush1.xpose.msra.mxu0 0.0
    %1247 = vmatprep.subr.mxu0 0.0
    %1248 = vmatpush1.xpose.msra.mxu0 0.0
    %1249 = vmatprep.subr.mxu0 0.0
    %1250 = vmatpush1.xpose.msra.mxu0 0.0
    %1251 = vmatprep.subr.mxu0 0.0
    %1252 = vmatpush1.xpose.msra.mxu0 0.0
    %1253 = vmatprep.subr.mxu0 0.0
    %1254 = vmatpush1.xpose.msra.mxu0 0.0
    %1255 = vmatprep.subr.mxu0 0.0
    %1256 = vmatpush1.xpose.msra.mxu0 0.0
    %1257 = vmatprep.mubr.f32.mxu0 0.0
    %1258 = vmatmul.mubr.f32.gmra.mrb[0].mxu0 %v1191
    %v1259 = vpop.f32.mrb[0].mxu0
    %v1260 = vadd.f32 0.0, %v1259
    %v1261 = vpop.f32.mrb[0].mxu0
    %1262 = vdwg.mxu0
    %vm1263 = vcmask 64512
    %v1264 = vsel %vm1263, %v749, -inf
    %1265 = vmax.xlane.f32.xlu0 %v1264
    %v1266 = vpop.xlane.xlu0 %1265
    %v1267 = vsel %vm1263, %v822, -inf
    %1268 = vmax.xlane.f32.xlu0 %v1267
    %v1269 = vpop.xlane.xlu0 %1268
    %v1270 = vsel %vm1263, %v895, -inf
    %1271 = vmax.xlane.f32.xlu0 %v1270
    %v1272 = vpop.xlane.xlu0 %1271
    %v1273 = vsel %vm1263, %v968, -inf
    %1274 = vmax.xlane.f32.xlu0 %v1273
    %v1275 = vpop.xlane.xlu0 %1274
    %v1276 = vsel %vm1263, %v1041, -inf
    %1277 = vmax.xlane.f32.xlu0 %v1276
    %v1278 = vpop.xlane.xlu0 %1277
    %v1279 = vsel %vm1263, %v1114, -inf
    %1280 = vmax.xlane.f32.xlu0 %v1279
    %v1281 = vpop.xlane.xlu0 %1280
    %v1282 = vsel %vm1263, %v1187, -inf
    %1283 = vmax.xlane.f32.xlu0 %v1282
    %v1284 = vpop.xlane.xlu0 %1283
    %v1285 = vsel %vm1263, %v1260, -inf
    %1286 = vmax.xlane.f32.xlu0 %v1285
    %v1287 = vpop.xlane.xlu0 %1286
    %v1288 = vsub.f32 %v749, %v1266
    %v1289 = vsub.f32 %v822, %v1269
    %v1290 = vsub.f32 %v895, %v1272
    %v1291 = vsub.f32 %v968, %v1275
    %v1292 = vsub.f32 %v1041, %v1278
    %v1293 = vsub.f32 %v1114, %v1281
    %v1294 = vsub.f32 %v1187, %v1284
    %v1295 = vsub.f32 %v1260, %v1287
    %v1296 = vmul.f32 %v1288, 1.442695
    %v1297 = vpow.pop %v1296
    %v1298 = vmul.f32 %v1289, 1.442695
    %v1299 = vpow.pop %v1298
    %v1300 = vmul.f32 %v1290, 1.442695
    %v1301 = vpow.pop %v1300
    %v1302 = vmul.f32 %v1291, 1.442695
    %v1303 = vpow.pop %v1302
    %v1304 = vmul.f32 %v1292, 1.442695
    %v1305 = vpow.pop %v1304
    %v1306 = vmul.f32 %v1293, 1.442695
    %v1307 = vpow.pop %v1306
    %v1308 = vmul.f32 %v1294, 1.442695
    %v1309 = vpow.pop %v1308
    %v1310 = vmul.f32 %v1295, 1.442695
    %v1311 = vpow.pop %v1310
    %v1312 = vsel %vm1263, %v1297, 0.0
    %1313 = vadd.xlane.f32.xlu0 %v1312
    %v1314 = vpop.xlane.xlu0 %1313
    %v1315 = vsel %vm1263, %v1299, 0.0
    %1316 = vadd.xlane.f32.xlu0 %v1315
    %v1317 = vpop.xlane.xlu0 %1316
    %v1318 = vsel %vm1263, %v1301, 0.0
    %1319 = vadd.xlane.f32.xlu0 %v1318
    %v1320 = vpop.xlane.xlu0 %1319
    %v1321 = vsel %vm1263, %v1303, 0.0
    %1322 = vadd.xlane.f32.xlu0 %v1321
    %v1323 = vpop.xlane.xlu0 %1322
    %v1324 = vsel %vm1263, %v1305, 0.0
    %1325 = vadd.xlane.f32.xlu0 %v1324
    %v1326 = vpop.xlane.xlu0 %1325
    %v1327 = vsel %vm1263, %v1307, 0.0
    %1328 = vadd.xlane.f32.xlu0 %v1327
    %v1329 = vpop.xlane.xlu0 %1328
    %v1330 = vsel %vm1263, %v1309, 0.0
    %1331 = vadd.xlane.f32.xlu0 %v1330
    %v1332 = vpop.xlane.xlu0 %1331
    %v1333 = vsel %vm1263, %v1311, 0.0
    %1334 = vadd.xlane.f32.xlu0 %v1333
    %v1335 = vpop.xlane.xlu0 %1334
    %v1336 = vrcp.pop %v1314
    %v1337 = vrcp.pop %v1317
    %v1338 = vrcp.pop %v1320
    %v1339 = vrcp.pop %v1323
    %v1340 = vrcp.pop %v1326
    %v1341 = vrcp.pop %v1329
    %v1342 = vrcp.pop %v1332
    %v1343 = vrcp.pop %v1335
    %v1344 = vmul.f32 %v1297, %v1336
    %v1345 = vmul.f32 %v1299, %v1337
    %v1346 = vmul.f32 %v1301, %v1338
    %v1347 = vmul.f32 %v1303, %v1339
    %v1348 = vmul.f32 %v1305, %v1340
    %v1349 = vmul.f32 %v1307, %v1341
    %v1350 = vmul.f32 %v1309, %v1342
    %v1351 = vmul.f32 %v1311, %v1343
    %v1353 = vsel %vm1263, %v1344, 0
    %1355 = vmatprep.subr.mxu0 0.0
    %1356 = vmatpush1.msra.mxu0 %v446
    %1357 = vmatprep.subr.mxu0 0.0
    %1358 = vmatpush1.msra.mxu0 0.0
    %1359 = vmatprep.subr.mxu0 0.0
    %1360 = vmatpush1.msra.mxu0 0.0
    %1361 = vmatprep.subr.mxu0 0.0
    %1362 = vmatpush1.msra.mxu0 0.0
    %1363 = vmatprep.subr.mxu0 0.0
    %1364 = vmatpush1.msra.mxu0 0.0
    %1365 = vmatprep.subr.mxu0 0.0
    %1366 = vmatpush1.msra.mxu0 0.0
    %1367 = vmatprep.subr.mxu0 0.0
    %1368 = vmatpush1.msra.mxu0 0.0
    %1369 = vmatprep.subr.mxu0 0.0
    %1370 = vmatpush1.msra.mxu0 0.0
    %1371 = vmatprep.subr.mxu0 0.0
    %1372 = vmatpush1.msra.mxu0 0.0
    %1373 = vmatprep.subr.mxu0 0.0
    %1374 = vmatpush1.msra.mxu0 0.0
    %1375 = vmatprep.subr.mxu0 0.0
    %1376 = vmatpush1.msra.mxu0 0.0
    %1377 = vmatprep.subr.mxu0 0.0
    %1378 = vmatpush1.msra.mxu0 0.0
    %1379 = vmatprep.subr.mxu0 0.0
    %1380 = vmatpush1.msra.mxu0 0.0
    %1381 = vmatprep.subr.mxu0 0.0
    %1382 = vmatpush1.msra.mxu0 0.0
    %1383 = vmatprep.subr.mxu0 0.0
    %1384 = vmatpush1.msra.mxu0 0.0
    %1385 = vmatprep.subr.mxu0 0.0
    %1386 = vmatpush1.msra.mxu0 0.0
    %1387 = vmatprep.subr.mxu0 0.0
    %1388 = vmatpush1.msra.mxu0 0.0
    %1389 = vmatprep.subr.mxu0 0.0
    %1390 = vmatpush1.msra.mxu0 0.0
    %1391 = vmatprep.subr.mxu0 0.0
    %1392 = vmatpush1.msra.mxu0 0.0
    %1393 = vmatprep.subr.mxu0 0.0
    %1394 = vmatpush1.msra.mxu0 0.0
    %1395 = vmatprep.subr.mxu0 0.0
    %1396 = vmatpush1.msra.mxu0 0.0
    %1397 = vmatprep.subr.mxu0 0.0
    %1398 = vmatpush1.msra.mxu0 0.0
    %1399 = vmatprep.subr.mxu0 0.0
    %1400 = vmatpush1.msra.mxu0 0.0
    %1401 = vmatprep.subr.mxu0 0.0
    %1402 = vmatpush1.msra.mxu0 0.0
    %1403 = vmatprep.subr.mxu0 0.0
    %1404 = vmatpush1.msra.mxu0 0.0
    %1405 = vmatprep.subr.mxu0 0.0
    %1406 = vmatpush1.msra.mxu0 0.0
    %1407 = vmatprep.subr.mxu0 0.0
    %1408 = vmatpush1.msra.mxu0 0.0
    %1409 = vmatprep.subr.mxu0 0.0
    %1410 = vmatpush1.msra.mxu0 0.0
    %1411 = vmatprep.subr.mxu0 0.0
    %1412 = vmatpush1.msra.mxu0 0.0
    %1413 = vmatprep.subr.mxu0 0.0
    %1414 = vmatpush1.msra.mxu0 0.0
    %1415 = vmatprep.subr.mxu0 0.0
    %1416 = vmatpush1.msra.mxu0 0.0
    %1417 = vmatprep.subr.mxu0 0.0
    %1418 = vmatpush1.msra.mxu0 0.0
    %1419 = vmatprep.mubr.f32.mxu0 0.0
    %1420 = vmatmul.mubr.f32.gmra.mrb[0].mxu0 %v1353
    %v1421 = vpop.f32.mrb[0].mxu0
    %v1422 = vadd.f32 0.0, %v1421
    %v1423 = vpop.f32.mrb[0].mxu0
    %1424 = vdwg.mxu0
    %v1426 = vsel %vm1263, %v1345, 0
    %1428 = vmatprep.subr.mxu0 0.0
    %1429 = vmatpush1.msra.mxu0 %v451
    %1430 = vmatprep.subr.mxu0 0.0
    %1431 = vmatpush1.msra.mxu0 0.0
    %1432 = vmatprep.subr.mxu0 0.0
    %1433 = vmatpush1.msra.mxu0 0.0
    %1434 = vmatprep.subr.mxu0 0.0
    %1435 = vmatpush1.msra.mxu0 0.0
    %1436 = vmatprep.subr.mxu0 0.0
    %1437 = vmatpush1.msra.mxu0 0.0
    %1438 = vmatprep.subr.mxu0 0.0
    %1439 = vmatpush1.msra.mxu0 0.0
    %1440 = vmatprep.subr.mxu0 0.0
    %1441 = vmatpush1.msra.mxu0 0.0
    %1442 = vmatprep.subr.mxu0 0.0
    %1443 = vmatpush1.msra.mxu0 0.0
    %1444 = vmatprep.subr.mxu0 0.0
    %1445 = vmatpush1.msra.mxu0 0.0
    %1446 = vmatprep.subr.mxu0 0.0
    %1447 = vmatpush1.msra.mxu0 0.0
    %1448 = vmatprep.subr.mxu0 0.0
    %1449 = vmatpush1.msra.mxu0 0.0
    %1450 = vmatprep.subr.mxu0 0.0
    %1451 = vmatpush1.msra.mxu0 0.0
    %1452 = vmatprep.subr.mxu0 0.0
    %1453 = vmatpush1.msra.mxu0 0.0
    %1454 = vmatprep.subr.mxu0 0.0
    %1455 = vmatpush1.msra.mxu0 0.0
    %1456 = vmatprep.subr.mxu0 0.0
    %1457 = vmatpush1.msra.mxu0 0.0
    %1458 = vmatprep.subr.mxu0 0.0
    %1459 = vmatpush1.msra.mxu0 0.0
    %1460 = vmatprep.subr.mxu0 0.0
    %1461 = vmatpush1.msra.mxu0 0.0
    %1462 = vmatprep.subr.mxu0 0.0
    %1463 = vmatpush1.msra.mxu0 0.0
    %1464 = vmatprep.subr.mxu0 0.0
    %1465 = vmatpush1.msra.mxu0 0.0
    %1466 = vmatprep.subr.mxu0 0.0
    %1467 = vmatpush1.msra.mxu0 0.0
    %1468 = vmatprep.subr.mxu0 0.0
    %1469 = vmatpush1.msra.mxu0 0.0
    %1470 = vmatprep.subr.mxu0 0.0
    %1471 = vmatpush1.msra.mxu0 0.0
    %1472 = vmatprep.subr.mxu0 0.0
    %1473 = vmatpush1.msra.mxu0 0.0
    %1474 = vmatprep.subr.mxu0 0.0
    %1475 = vmatpush1.msra.mxu0 0.0
    %1476 = vmatprep.subr.mxu0 0.0
    %1477 = vmatpush1.msra.mxu0 0.0
    %1478 = vmatprep.subr.mxu0 0.0
    %1479 = vmatpush1.msra.mxu0 0.0
    %1480 = vmatprep.subr.mxu0 0.0
    %1481 = vmatpush1.msra.mxu0 0.0
    %1482 = vmatprep.subr.mxu0 0.0
    %1483 = vmatpush1.msra.mxu0 0.0
    %1484 = vmatprep.subr.mxu0 0.0
    %1485 = vmatpush1.msra.mxu0 0.0
    %1486 = vmatprep.subr.mxu0 0.0
    %1487 = vmatpush1.msra.mxu0 0.0
    %1488 = vmatprep.subr.mxu0 0.0
    %1489 = vmatpush1.msra.mxu0 0.0
    %1490 = vmatprep.subr.mxu0 0.0
    %1491 = vmatpush1.msra.mxu0 0.0
    %1492 = vmatprep.mubr.f32.mxu0 0.0
    %1493 = vmatmul.mubr.f32.gmra.mrb[0].mxu0 %v1426
    %v1494 = vpop.f32.mrb[0].mxu0
    %v1495 = vadd.f32 0.0, %v1494
    %v1496 = vpop.f32.mrb[0].mxu0
    %1497 = vdwg.mxu0
    %v1499 = vsel %vm1263, %v1346, 0
    %1501 = vmatprep.subr.mxu0 0.0
    %1502 = vmatpush1.msra.mxu0 %v521
    %1503 = vmatprep.subr.mxu0 0.0
    %1504 = vmatpush1.msra.mxu0 0.0
    %1505 = vmatprep.subr.mxu0 0.0
    %1506 = vmatpush1.msra.mxu0 0.0
    %1507 = vmatprep.subr.mxu0 0.0
    %1508 = vmatpush1.msra.mxu0 0.0
    %1509 = vmatprep.subr.mxu0 0.0
    %1510 = vmatpush1.msra.mxu0 0.0
    %1511 = vmatprep.subr.mxu0 0.0
    %1512 = vmatpush1.msra.mxu0 0.0
    %1513 = vmatprep.subr.mxu0 0.0
    %1514 = vmatpush1.msra.mxu0 0.0
    %1515 = vmatprep.subr.mxu0 0.0
    %1516 = vmatpush1.msra.mxu0 0.0
    %1517 = vmatprep.subr.mxu0 0.0
    %1518 = vmatpush1.msra.mxu0 0.0
    %1519 = vmatprep.subr.mxu0 0.0
    %1520 = vmatpush1.msra.mxu0 0.0
    %1521 = vmatprep.subr.mxu0 0.0
    %1522 = vmatpush1.msra.mxu0 0.0
    %1523 = vmatprep.subr.mxu0 0.0
    %1524 = vmatpush1.msra.mxu0 0.0
    %1525 = vmatprep.subr.mxu0 0.0
    %1526 = vmatpush1.msra.mxu0 0.0
    %1527 = vmatprep.subr.mxu0 0.0
    %1528 = vmatpush1.msra.mxu0 0.0
    %1529 = vmatprep.subr.mxu0 0.0
    %1530 = vmatpush1.msra.mxu0 0.0
    %1531 = vmatprep.subr.mxu0 0.0
    %1532 = vmatpush1.msra.mxu0 0.0
    %1533 = vmatprep.subr.mxu0 0.0
    %1534 = vmatpush1.msra.mxu0 0.0
    %1535 = vmatprep.subr.mxu0 0.0
    %1536 = vmatpush1.msra.mxu0 0.0
    %1537 = vmatprep.subr.mxu0 0.0
    %1538 = vmatpush1.msra.mxu0 0.0
    %1539 = vmatprep.subr.mxu0 0.0
    %1540 = vmatpush1.msra.mxu0 0.0
    %1541 = vmatprep.subr.mxu0 0.0
    %1542 = vmatpush1.msra.mxu0 0.0
    %1543 = vmatprep.subr.mxu0 0.0
    %1544 = vmatpush1.msra.mxu0 0.0
    %1545 = vmatprep.subr.mxu0 0.0
    %1546 = vmatpush1.msra.mxu0 0.0
    %1547 = vmatprep.subr.mxu0 0.0
    %1548 = vmatpush1.msra.mxu0 0.0
    %1549 = vmatprep.subr.mxu0 0.0
    %1550 = vmatpush1.msra.mxu0 0.0
    %1551 = vmatprep.subr.mxu0 0.0
    %1552 = vmatpush1.msra.mxu0 0.0
    %1553 = vmatprep.subr.mxu0 0.0
    %1554 = vmatpush1.msra.mxu0 0.0
    %1555 = vmatprep.subr.mxu0 0.0
    %1556 = vmatpush1.msra.mxu0 0.0
    %1557 = vmatprep.subr.mxu0 0.0
    %1558 = vmatpush1.msra.mxu0 0.0
    %1559 = vmatprep.subr.mxu0 0.0
    %1560 = vmatpush1.msra.mxu0 0.0
    %1561 = vmatprep.subr.mxu0 0.0
    %1562 = vmatpush1.msra.mxu0 0.0
    %1563 = vmatprep.subr.mxu0 0.0
    %1564 = vmatpush1.msra.mxu0 0.0
    %1565 = vmatprep.mubr.f32.mxu0 0.0
    %1566 = vmatmul.mubr.f32.gmra.mrb[0].mxu0 %v1499
    %v1567 = vpop.f32.mrb[0].mxu0
    %v1568 = vadd.f32 0.0, %v1567
    %v1569 = vpop.f32.mrb[0].mxu0
    %1570 = vdwg.mxu0
    %v1572 = vsel %vm1263, %v1347, 0
    %1574 = vmatprep.subr.mxu0 0.0
    %1575 = vmatpush1.msra.mxu0 %v526
    %1576 = vmatprep.subr.mxu0 0.0
    %1577 = vmatpush1.msra.mxu0 0.0
    %1578 = vmatprep.subr.mxu0 0.0
    %1579 = vmatpush1.msra.mxu0 0.0
    %1580 = vmatprep.subr.mxu0 0.0
    %1581 = vmatpush1.msra.mxu0 0.0
    %1582 = vmatprep.subr.mxu0 0.0
    %1583 = vmatpush1.msra.mxu0 0.0
    %1584 = vmatprep.subr.mxu0 0.0
    %1585 = vmatpush1.msra.mxu0 0.0
    %1586 = vmatprep.subr.mxu0 0.0
    %1587 = vmatpush1.msra.mxu0 0.0
    %1588 = vmatprep.subr.mxu0 0.0
    %1589 = vmatpush1.msra.mxu0 0.0
    %1590 = vmatprep.subr.mxu0 0.0
    %1591 = vmatpush1.msra.mxu0 0.0
    %1592 = vmatprep.subr.mxu0 0.0
    %1593 = vmatpush1.msra.mxu0 0.0
    %1594 = vmatprep.subr.mxu0 0.0
    %1595 = vmatpush1.msra.mxu0 0.0
    %1596 = vmatprep.subr.mxu0 0.0
    %1597 = vmatpush1.msra.mxu0 0.0
    %1598 = vmatprep.subr.mxu0 0.0
    %1599 = vmatpush1.msra.mxu0 0.0
    %1600 = vmatprep.subr.mxu0 0.0
    %1601 = vmatpush1.msra.mxu0 0.0
    %1602 = vmatprep.subr.mxu0 0.0
    %1603 = vmatpush1.msra.mxu0 0.0
    %1604 = vmatprep.subr.mxu0 0.0
    %1605 = vmatpush1.msra.mxu0 0.0
    %1606 = vmatprep.subr.mxu0 0.0
    %1607 = vmatpush1.msra.mxu0 0.0
    %1608 = vmatprep.subr.mxu0 0.0
    %1609 = vmatpush1.msra.mxu0 0.0
    %1610 = vmatprep.subr.mxu0 0.0
    %1611 = vmatpush1.msra.mxu0 0.0
    %1612 = vmatprep.subr.mxu0 0.0
    %1613 = vmatpush1.msra.mxu0 0.0
    %1614 = vmatprep.subr.mxu0 0.0
    %1615 = vmatpush1.msra.mxu0 0.0
    %1616 = vmatprep.subr.mxu0 0.0
    %1617 = vmatpush1.msra.mxu0 0.0
    %1618 = vmatprep.subr.mxu0 0.0
    %1619 = vmatpush1.msra.mxu0 0.0
    %1620 = vmatprep.subr.mxu0 0.0
    %1621 = vmatpush1.msra.mxu0 0.0
    %1622 = vmatprep.subr.mxu0 0.0
    %1623 = vmatpush1.msra.mxu0 0.0
    %1624 = vmatprep.subr.mxu0 0.0
    %1625 = vmatpush1.msra.mxu0 0.0
    %1626 = vmatprep.subr.mxu0 0.0
    %1627 = vmatpush1.msra.mxu0 0.0
    %1628 = vmatprep.subr.mxu0 0.0
    %1629 = vmatpush1.msra.mxu0 0.0
    %1630 = vmatprep.subr.mxu0 0.0
    %1631 = vmatpush1.msra.mxu0 0.0
    %1632 = vmatprep.subr.mxu0 0.0
    %1633 = vmatpush1.msra.mxu0 0.0
    %1634 = vmatprep.subr.mxu0 0.0
    %1635 = vmatpush1.msra.mxu0 0.0
    %1636 = vmatprep.subr.mxu0 0.0
    %1637 = vmatpush1.msra.mxu0 0.0
    %1638 = vmatprep.mubr.f32.mxu0 0.0
    %1639 = vmatmul.mubr.f32.gmra.mrb[0].mxu0 %v1572
    %v1640 = vpop.f32.mrb[0].mxu0
    %v1641 = vadd.f32 0.0, %v1640
    %v1642 = vpop.f32.mrb[0].mxu0
    %1643 = vdwg.mxu0
    %v1645 = vsel %vm1263, %v1348, 0
    %1647 = vmatprep.subr.mxu0 0.0
    %1648 = vmatpush1.msra.mxu0 %v596
    %1649 = vmatprep.subr.mxu0 0.0
    %1650 = vmatpush1.msra.mxu0 0.0
    %1651 = vmatprep.subr.mxu0 0.0
    %1652 = vmatpush1.msra.mxu0 0.0
    %1653 = vmatprep.subr.mxu0 0.0
    %1654 = vmatpush1.msra.mxu0 0.0
    %1655 = vmatprep.subr.mxu0 0.0
    %1656 = vmatpush1.msra.mxu0 0.0
    %1657 = vmatprep.subr.mxu0 0.0
    %1658 = vmatpush1.msra.mxu0 0.0
    %1659 = vmatprep.subr.mxu0 0.0
    %1660 = vmatpush1.msra.mxu0 0.0
    %1661 = vmatprep.subr.mxu0 0.0
    %1662 = vmatpush1.msra.mxu0 0.0
    %1663 = vmatprep.subr.mxu0 0.0
    %1664 = vmatpush1.msra.mxu0 0.0
    %1665 = vmatprep.subr.mxu0 0.0
    %1666 = vmatpush1.msra.mxu0 0.0
    %1667 = vmatprep.subr.mxu0 0.0
    %1668 = vmatpush1.msra.mxu0 0.0
    %1669 = vmatprep.subr.mxu0 0.0
    %1670 = vmatpush1.msra.mxu0 0.0
    %1671 = vmatprep.subr.mxu0 0.0
    %1672 = vmatpush1.msra.mxu0 0.0
    %1673 = vmatprep.subr.mxu0 0.0
    %1674 = vmatpush1.msra.mxu0 0.0
    %1675 = vmatprep.subr.mxu0 0.0
    %1676 = vmatpush1.msra.mxu0 0.0
    %1677 = vmatprep.subr.mxu0 0.0
    %1678 = vmatpush1.msra.mxu0 0.0
    %1679 = vmatprep.subr.mxu0 0.0
    %1680 = vmatpush1.msra.mxu0 0.0
    %1681 = vmatprep.subr.mxu0 0.0
    %1682 = vmatpush1.msra.mxu0 0.0
    %1683 = vmatprep.subr.mxu0 0.0
    %1684 = vmatpush1.msra.mxu0 0.0
    %1685 = vmatprep.subr.mxu0 0.0
    %1686 = vmatpush1.msra.mxu0 0.0
    %1687 = vmatprep.subr.mxu0 0.0
    %1688 = vmatpush1.msra.mxu0 0.0
    %1689 = vmatprep.subr.mxu0 0.0
    %1690 = vmatpush1.msra.mxu0 0.0
    %1691 = vmatprep.subr.mxu0 0.0
    %1692 = vmatpush1.msra.mxu0 0.0
    %1693 = vmatprep.subr.mxu0 0.0
    %1694 = vmatpush1.msra.mxu0 0.0
    %1695 = vmatprep.subr.mxu0 0.0
    %1696 = vmatpush1.msra.mxu0 0.0
    %1697 = vmatprep.subr.mxu0 0.0
    %1698 = vmatpush1.msra.mxu0 0.0
    %1699 = vmatprep.subr.mxu0 0.0
    %1700 = vmatpush1.msra.mxu0 0.0
    %1701 = vmatprep.subr.mxu0 0.0
    %1702 = vmatpush1.msra.mxu0 0.0
    %1703 = vmatprep.subr.mxu0 0.0
    %1704 = vmatpush1.msra.mxu0 0.0
    %1705 = vmatprep.subr.mxu0 0.0
    %1706 = vmatpush1.msra.mxu0 0.0
    %1707 = vmatprep.subr.mxu0 0.0
    %1708 = vmatpush1.msra.mxu0 0.0
    %1709 = vmatprep.subr.mxu0 0.0
    %1710 = vmatpush1.msra.mxu0 0.0
    %1711 = vmatprep.mubr.f32.mxu0 0.0
    %1712 = vmatmul.mubr.f32.gmra.mrb[0].mxu0 %v1645
    %v1713 = vpop.f32.mrb[0].mxu0
    %v1714 = vadd.f32 0.0, %v1713
    %v1715 = vpop.f32.mrb[0].mxu0
    %1716 = vdwg.mxu0
    %v1718 = vsel %vm1263, %v1349, 0
    %1720 = vmatprep.subr.mxu0 0.0
    %1721 = vmatpush1.msra.mxu0 %v601
    %1722 = vmatprep.subr.mxu0 0.0
    %1723 = vmatpush1.msra.mxu0 0.0
    %1724 = vmatprep.subr.mxu0 0.0
    %1725 = vmatpush1.msra.mxu0 0.0
    %1726 = vmatprep.subr.mxu0 0.0
    %1727 = vmatpush1.msra.mxu0 0.0
    %1728 = vmatprep.subr.mxu0 0.0
    %1729 = vmatpush1.msra.mxu0 0.0
    %1730 = vmatprep.subr.mxu0 0.0
    %1731 = vmatpush1.msra.mxu0 0.0
    %1732 = vmatprep.subr.mxu0 0.0
    %1733 = vmatpush1.msra.mxu0 0.0
    %1734 = vmatprep.subr.mxu0 0.0
    %1735 = vmatpush1.msra.mxu0 0.0
    %1736 = vmatprep.subr.mxu0 0.0
    %1737 = vmatpush1.msra.mxu0 0.0
    %1738 = vmatprep.subr.mxu0 0.0
    %1739 = vmatpush1.msra.mxu0 0.0
    %1740 = vmatprep.subr.mxu0 0.0
    %1741 = vmatpush1.msra.mxu0 0.0
    %1742 = vmatprep.subr.mxu0 0.0
    %1743 = vmatpush1.msra.mxu0 0.0
    %1744 = vmatprep.subr.mxu0 0.0
    %1745 = vmatpush1.msra.mxu0 0.0
    %1746 = vmatprep.subr.mxu0 0.0
    %1747 = vmatpush1.msra.mxu0 0.0
    %1748 = vmatprep.subr.mxu0 0.0
    %1749 = vmatpush1.msra.mxu0 0.0
    %1750 = vmatprep.subr.mxu0 0.0
    %1751 = vmatpush1.msra.mxu0 0.0
    %1752 = vmatprep.subr.mxu0 0.0
    %1753 = vmatpush1.msra.mxu0 0.0
    %1754 = vmatprep.subr.mxu0 0.0
    %1755 = vmatpush1.msra.mxu0 0.0
    %1756 = vmatprep.subr.mxu0 0.0
    %1757 = vmatpush1.msra.mxu0 0.0
    %1758 = vmatprep.subr.mxu0 0.0
    %1759 = vmatpush1.msra.mxu0 0.0
    %1760 = vmatprep.subr.mxu0 0.0
    %1761 = vmatpush1.msra.mxu0 0.0
    %1762 = vmatprep.subr.mxu0 0.0
    %1763 = vmatpush1.msra.mxu0 0.0
    %1764 = vmatprep.subr.mxu0 0.0
    %1765 = vmatpush1.msra.mxu0 0.0
    %1766 = vmatprep.subr.mxu0 0.0
    %1767 = vmatpush1.msra.mxu0 0.0
    %1768 = vmatprep.subr.mxu0 0.0
    %1769 = vmatpush1.msra.mxu0 0.0
    %1770 = vmatprep.subr.mxu0 0.0
    %1771 = vmatpush1.msra.mxu0 0.0
    %1772 = vmatprep.subr.mxu0 0.0
    %1773 = vmatpush1.msra.mxu0 0.0
    %1774 = vmatprep.subr.mxu0 0.0
    %1775 = vmatpush1.msra.mxu0 0.0
    %1776 = vmatprep.subr.mxu0 0.0
    %1777 = vmatpush1.msra.mxu0 0.0
    %1778 = vmatprep.subr.mxu0 0.0
    %1779 = vmatpush1.msra.mxu0 0.0
    %1780 = vmatprep.subr.mxu0 0.0
    %1781 = vmatpush1.msra.mxu0 0.0
    %1782 = vmatprep.subr.mxu0 0.0
    %1783 = vmatpush1.msra.mxu0 0.0
    %1784 = vmatprep.mubr.f32.mxu0 0.0
    %1785 = vmatmul.mubr.f32.gmra.mrb[0].mxu0 %v1718
    %v1786 = vpop.f32.mrb[0].mxu0
    %v1787 = vadd.f32 0.0, %v1786
    %v1788 = vpop.f32.mrb[0].mxu0
    %1789 = vdwg.mxu0
    %v1791 = vsel %vm1263, %v1350, 0
    %1793 = vmatprep.subr.mxu0 0.0
    %1794 = vmatpush1.msra.mxu0 %v671
    %1795 = vmatprep.subr.mxu0 0.0
    %1796 = vmatpush1.msra.mxu0 0.0
    %1797 = vmatprep.subr.mxu0 0.0
    %1798 = vmatpush1.msra.mxu0 0.0
    %1799 = vmatprep.subr.mxu0 0.0
    %1800 = vmatpush1.msra.mxu0 0.0
    %1801 = vmatprep.subr.mxu0 0.0
    %1802 = vmatpush1.msra.mxu0 0.0
    %1803 = vmatprep.subr.mxu0 0.0
    %1804 = vmatpush1.msra.mxu0 0.0
    %1805 = vmatprep.subr.mxu0 0.0
    %1806 = vmatpush1.msra.mxu0 0.0
    %1807 = vmatprep.subr.mxu0 0.0
    %1808 = vmatpush1.msra.mxu0 0.0
    %1809 = vmatprep.subr.mxu0 0.0
    %1810 = vmatpush1.msra.mxu0 0.0
    %1811 = vmatprep.subr.mxu0 0.0
    %1812 = vmatpush1.msra.mxu0 0.0
    %1813 = vmatprep.subr.mxu0 0.0
    %1814 = vmatpush1.msra.mxu0 0.0
    %1815 = vmatprep.subr.mxu0 0.0
    %1816 = vmatpush1.msra.mxu0 0.0
    %1817 = vmatprep.subr.mxu0 0.0
    %1818 = vmatpush1.msra.mxu0 0.0
    %1819 = vmatprep.subr.mxu0 0.0
    %1820 = vmatpush1.msra.mxu0 0.0
    %1821 = vmatprep.subr.mxu0 0.0
    %1822 = vmatpush1.msra.mxu0 0.0
    %1823 = vmatprep.subr.mxu0 0.0
    %1824 = vmatpush1.msra.mxu0 0.0
    %1825 = vmatprep.subr.mxu0 0.0
    %1826 = vmatpush1.msra.mxu0 0.0
    %1827 = vmatprep.subr.mxu0 0.0
    %1828 = vmatpush1.msra.mxu0 0.0
    %1829 = vmatprep.subr.mxu0 0.0
    %1830 = vmatpush1.msra.mxu0 0.0
    %1831 = vmatprep.subr.mxu0 0.0
    %1832 = vmatpush1.msra.mxu0 0.0
    %1833 = vmatprep.subr.mxu0 0.0
    %1834 = vmatpush1.msra.mxu0 0.0
    %1835 = vmatprep.subr.mxu0 0.0
    %1836 = vmatpush1.msra.mxu0 0.0
    %1837 = vmatprep.subr.mxu0 0.0
    %1838 = vmatpush1.msra.mxu0 0.0
    %1839 = vmatprep.subr.mxu0 0.0
    %1840 = vmatpush1.msra.mxu0 0.0
    %1841 = vmatprep.subr.mxu0 0.0
    %1842 = vmatpush1.msra.mxu0 0.0
    %1843 = vmatprep.subr.mxu0 0.0
    %1844 = vmatpush1.msra.mxu0 0.0
    %1845 = vmatprep.subr.mxu0 0.0
    %1846 = vmatpush1.msra.mxu0 0.0
    %1847 = vmatprep.subr.mxu0 0.0
    %1848 = vmatpush1.msra.mxu0 0.0
    %1849 = vmatprep.subr.mxu0 0.0
    %1850 = vmatpush1.msra.mxu0 0.0
    %1851 = vmatprep.subr.mxu0 0.0
    %1852 = vmatpush1.msra.mxu0 0.0
    %1853 = vmatprep.subr.mxu0 0.0
    %1854 = vmatpush1.msra.mxu0 0.0
    %1855 = vmatprep.subr.mxu0 0.0
    %1856 = vmatpush1.msra.mxu0 0.0
    %1857 = vmatprep.mubr.f32.mxu0 0.0
    %1858 = vmatmul.mubr.f32.gmra.mrb[0].mxu0 %v1791
    %v1859 = vpop.f32.mrb[0].mxu0
    %v1860 = vadd.f32 0.0, %v1859
    %v1861 = vpop.f32.mrb[0].mxu0
    %1862 = vdwg.mxu0
    %v1864 = vsel %vm1263, %v1351, 0
    %1866 = vmatprep.subr.mxu0 0.0
    %1867 = vmatpush1.msra.mxu0 %v676
    %1868 = vmatprep.subr.mxu0 0.0
    %1869 = vmatpush1.msra.mxu0 0.0
    %1870 = vmatprep.subr.mxu0 0.0
    %1871 = vmatpush1.msra.mxu0 0.0
    %1872 = vmatprep.subr.mxu0 0.0
    %1873 = vmatpush1.msra.mxu0 0.0
    %1874 = vmatprep.subr.mxu0 0.0
    %1875 = vmatpush1.msra.mxu0 0.0
    %1876 = vmatprep.subr.mxu0 0.0
    %1877 = vmatpush1.msra.mxu0 0.0
    %1878 = vmatprep.subr.mxu0 0.0
    %1879 = vmatpush1.msra.mxu0 0.0
    %1880 = vmatprep.subr.mxu0 0.0
    %1881 = vmatpush1.msra.mxu0 0.0
    %1882 = vmatprep.subr.mxu0 0.0
    %1883 = vmatpush1.msra.mxu0 0.0
    %1884 = vmatprep.subr.mxu0 0.0
    %1885 = vmatpush1.msra.mxu0 0.0
    %1886 = vmatprep.subr.mxu0 0.0
    %1887 = vmatpush1.msra.mxu0 0.0
    %1888 = vmatprep.subr.mxu0 0.0
    %1889 = vmatpush1.msra.mxu0 0.0
    %1890 = vmatprep.subr.mxu0 0.0
    %1891 = vmatpush1.msra.mxu0 0.0
    %1892 = vmatprep.subr.mxu0 0.0
    %1893 = vmatpush1.msra.mxu0 0.0
    %1894 = vmatprep.subr.mxu0 0.0
    %1895 = vmatpush1.msra.mxu0 0.0
    %1896 = vmatprep.subr.mxu0 0.0
    %1897 = vmatpush1.msra.mxu0 0.0
    %1898 = vmatprep.subr.mxu0 0.0
    %1899 = vmatpush1.msra.mxu0 0.0
    %1900 = vmatprep.subr.mxu0 0.0
    %1901 = vmatpush1.msra.mxu0 0.0
    %1902 = vmatprep.subr.mxu0 0.0
    %1903 = vmatpush1.msra.mxu0 0.0
    %1904 = vmatprep.subr.mxu0 0.0
    %1905 = vmatpush1.msra.mxu0 0.0
    %1906 = vmatprep.subr.mxu0 0.0
    %1907 = vmatpush1.msra.mxu0 0.0
    %1908 = vmatprep.subr.mxu0 0.0
    %1909 = vmatpush1.msra.mxu0 0.0
    %1910 = vmatprep.subr.mxu0 0.0
    %1911 = vmatpush1.msra.mxu0 0.0
    %1912 = vmatprep.subr.mxu0 0.0
    %1913 = vmatpush1.msra.mxu0 0.0
    %1914 = vmatprep.subr.mxu0 0.0
    %1915 = vmatpush1.msra.mxu0 0.0
    %1916 = vmatprep.subr.mxu0 0.0
    %1917 = vmatpush1.msra.mxu0 0.0
    %1918 = vmatprep.subr.mxu0 0.0
    %1919 = vmatpush1.msra.mxu0 0.0
    %1920 = vmatprep.subr.mxu0 0.0
    %1921 = vmatpush1.msra.mxu0 0.0
    %1922 = vmatprep.subr.mxu0 0.0
    %1923 = vmatpush1.msra.mxu0 0.0
    %1924 = vmatprep.subr.mxu0 0.0
    %1925 = vmatpush1.msra.mxu0 0.0
    %1926 = vmatprep.subr.mxu0 0.0
    %1927 = vmatpush1.msra.mxu0 0.0
    %1928 = vmatprep.subr.mxu0 0.0
    %1929 = vmatpush1.msra.mxu0 0.0
    %1930 = vmatprep.mubr.f32.mxu0 0.0
    %1931 = vmatmul.mubr.f32.gmra.mrb[0].mxu0 %v1864
    %v1932 = vpop.f32.mrb[0].mxu0
    %v1933 = vadd.f32 0.0, %v1932
    %v1934 = vpop.f32.mrb[0].mxu0
    %1935 = vdwg.mxu0
    %v1936 = vsel %vm72, %v1422, 0.0
    %v1937 = vsel %vm72, %v1568, 0.0
    %v1938 = vadd.f32 %v1936, %v1937
    %v1939 = vsel %vm72, %v1714, 0.0
    %v1940 = vadd.f32 %v1938, %v1939
    %v1941 = vsel %vm72, %v1860, 0.0
    %v1942 = vadd.f32 %v1940, %v1941
    %v1943 = vsel %vm72, %v1495, 0.0
    %v1944 = vsel %vm72, %v1641, 0.0
    %v1945 = vadd.f32 %v1943, %v1944
    %v1946 = vsel %vm72, %v1787, 0.0
    %v1947 = vadd.f32 %v1945, %v1946
    %v1948 = vsel %vm72, %v1933, 0.0
    %v1949 = vadd.f32 %v1947, %v1948
    %v1950 = vld [vmem:[%s4] sm:$0x1]
    %v1951 = vlaneseq
    %v1952 = vshrl.u32 %v1951, 7
    %v1953 = vsub.s32 0, %v1952
    %v1954 = vrot.slane %v1950, %v1953
    %v1955 = vadd.f32 %v1942, %v1954
    %v1956 = vadd.f32 %v1949, %v1954
    %v1957 = vadd.f32 %v1955, %v38
    %v1958 = vadd.f32 %v1956, %v39
    %v1959 = vld [vmem:[%s4 + $0x1] sm:$0x1]
    %v1960 = vld [vmem:[%s4 + $0x2] sm:$0x1]
    %v1961 = vsel %vm72, %v1957, 0.0
    %1962 = vadd.xlane.f32.xlu0 %v1961
    %v1963 = vpop.xlane.xlu0 %1962
    %v1964 = vsel %vm72, %v1958, 0.0
    %1965 = vadd.xlane.f32.xlu0 %v1964
    %v1966 = vpop.xlane.xlu0 %1965
    %v1967 = vrcp.pop 32.0
    %v1968 = vmul.f32 %v1963, %v1967
    %v1969 = vmul.f32 %v1966, %v1967
    %v1970 = vsub.f32 %v1957, %v1968
    %v1971 = vsub.f32 %v1958, %v1969
    %v1972 = vmul.f32 %v1970, %v1970
    %v1973 = vmul.f32 %v1971, %v1971
    %v1974 = vsel %vm72, %v1972, 0.0
    %1975 = vadd.xlane.f32.xlu0 %v1974
    %v1976 = vpop.xlane.xlu0 %1975
    %v1977 = vsel %vm72, %v1973, 0.0
    %1978 = vadd.xlane.f32.xlu0 %v1977
    %v1979 = vpop.xlane.xlu0 %1978
    %v1980 = vmul.f32 %v1976, %v1967
    %v1981 = vmul.f32 %v1979, %v1967
    %v1982 = vadd.f32 %v1980, 1e-05
    %v1983 = vadd.f32 %v1981, 1e-05
    %v1984 = vrsqrt.pop %v1982
    %v1985 = vrsqrt.pop %v1983
    %v1986 = vmul.f32 %v1970, %v1984
    %v1987 = vmul.f32 %v1971, %v1985
    %v1988 = vlaneseq
    %v1989 = vshrl.u32 %v1988, 7
    %v1990 = vsub.s32 0, %v1989
    %v1991 = vrot.slane %v1959, %v1990
    %v1992 = vmul.f32 %v1986, %v1991
    %v1993 = vmul.f32 %v1987, %v1991
    %v1994 = vlaneseq
    %v1995 = vshrl.u32 %v1994, 7
    %v1996 = vsub.s32 0, %v1995
    %v1997 = vrot.slane %v1960, %v1996
    %v1998 = vadd.f32 %v1992, %v1997
    %v1999 = vadd.f32 %v1993, %v1997
    %v2000 = vld [vmem:[%s2] sm:$0xff]
    %v2001 = vld [vmem:[%s2 + $0x8] sm:$0xff]
    %v2002 = vld [vmem:[%s2 + $0x10] sm:$0xff]
    %v2003 = vld [vmem:[%s2 + $0x18] sm:$0xff]
    %v2004 = vld [vmem:[%s5] sm:$0x1]
    %v2006 = vlaneseq
    %v2007 = vshrl.u32 %v2006, 7
    %v2008 = vsub.s32 0, %v2007
    %v2009 = vrot.slane %v2004, %v2008
    %v2012 = vsel %vm72, %v1998, 0
    %v2015 = vsel %vm72, %v1999, 0
    %2017 = vmatprep.subr.mxu0 0.0
    %2018 = vmatpush1.msra.mxu0 %v2000
    %2019 = vmatprep.subr.mxu0 0.0
    %2020 = vmatpush1.msra.mxu0 %v2001
    %2021 = vmatprep.subr.mxu0 0.0
    %2022 = vmatpush1.msra.mxu0 %v2002
    %2023 = vmatprep.subr.mxu0 0.0
    %2024 = vmatpush1.msra.mxu0 %v2003
    %2025 = vmatprep.subr.mxu0 0.0
    %2026 = vmatpush1.msra.mxu0 0.0
    %2027 = vmatprep.subr.mxu0 0.0
    %2028 = vmatpush1.msra.mxu0 0.0
    %2029 = vmatprep.subr.mxu0 0.0
    %2030 = vmatpush1.msra.mxu0 0.0
    %2031 = vmatprep.subr.mxu0 0.0
    %2032 = vmatpush1.msra.mxu0 0.0
    %2033 = vmatprep.subr.mxu0 0.0
    %2034 = vmatpush1.msra.mxu0 0.0
    %2035 = vmatprep.subr.mxu0 0.0
    %2036 = vmatpush1.msra.mxu0 0.0
    %2037 = vmatprep.subr.mxu0 0.0
    %2038 = vmatpush1.msra.mxu0 0.0
    %2039 = vmatprep.subr.mxu0 0.0
    %2040 = vmatpush1.msra.mxu0 0.0
    %2041 = vmatprep.subr.mxu0 0.0
    %2042 = vmatpush1.msra.mxu0 0.0
    %2043 = vmatprep.subr.mxu0 0.0
    %2044 = vmatpush1.msra.mxu0 0.0
    %2045 = vmatprep.subr.mxu0 0.0
    %2046 = vmatpush1.msra.mxu0 0.0
    %2047 = vmatprep.subr.mxu0 0.0
    %2048 = vmatpush1.msra.mxu0 0.0
    %2049 = vmatprep.subr.mxu0 0.0
    %2050 = vmatpush1.msra.mxu0 0.0
    %2051 = vmatprep.subr.mxu0 0.0
    %2052 = vmatpush1.msra.mxu0 0.0
    %2053 = vmatprep.subr.mxu0 0.0
    %2054 = vmatpush1.msra.mxu0 0.0
    %2055 = vmatprep.subr.mxu0 0.0
    %2056 = vmatpush1.msra.mxu0 0.0
    %2057 = vmatprep.subr.mxu0 0.0
    %2058 = vmatpush1.msra.mxu0 0.0
    %2059 = vmatprep.subr.mxu0 0.0
    %2060 = vmatpush1.msra.mxu0 0.0
    %2061 = vmatprep.subr.mxu0 0.0
    %2062 = vmatpush1.msra.mxu0 0.0
    %2063 = vmatprep.subr.mxu0 0.0
    %2064 = vmatpush1.msra.mxu0 0.0
    %2065 = vmatprep.subr.mxu0 0.0
    %2066 = vmatpush1.msra.mxu0 0.0
    %2067 = vmatprep.subr.mxu0 0.0
    %2068 = vmatpush1.msra.mxu0 0.0
    %2069 = vmatprep.subr.mxu0 0.0
    %2070 = vmatpush1.msra.mxu0 0.0
    %2071 = vmatprep.subr.mxu0 0.0
    %2072 = vmatpush1.msra.mxu0 0.0
    %2073 = vmatprep.subr.mxu0 0.0
    %2074 = vmatpush1.msra.mxu0 0.0
    %2075 = vmatprep.subr.mxu0 0.0
    %2076 = vmatpush1.msra.mxu0 0.0
    %2077 = vmatprep.subr.mxu0 0.0
    %2078 = vmatpush1.msra.mxu0 0.0
    %2079 = vmatprep.subr.mxu0 0.0
    %2080 = vmatpush1.msra.mxu0 0.0
    %2081 = vmatprep.mubr.f32.mxu0 0.0
    %2082 = vmatmul.mubr.f32.gmra.mrb[0].mxu0 %v2012
    %v2083 = vpop.f32.mrb[0].mxu0
    %v2084 = vadd.f32 %v2009, %v2083
    %v2085 = vpop.f32.mrb[0].mxu0
    %2086 = vmatprep.mubr.f32.mxu0 0.0
    %2087 = vmatmul.mubr.f32.gmra.mrb[0].mxu0 %v2015
    %v2088 = vpop.f32.mrb[0].mxu0
    %v2089 = vadd.f32 %v2009, %v2088
    %v2090 = vpop.f32.mrb[0].mxu0
    %2091 = vdwg.mxu0
    %v2092 = vmax.f32 %v2084, 0.0
    %v2093 = vmax.f32 %v2089, 0.0
    %v2094 = vld [vmem:[%s3] sm:$0xff]
    %v2095 = vld [vmem:[%s3 + $0x8] sm:$0xff]
    %v2096 = vld [vmem:[%s3 + $0x10] sm:$0xff]
    %v2097 = vld [vmem:[%s3 + $0x18] sm:$0xff]
    %v2098 = vld [vmem:[%s3 + $0x20] sm:$0xff]
    %v2099 = vld [vmem:[%s3 + $0x28] sm:$0xff]
    %v2100 = vld [vmem:[%s3 + $0x30] sm:$0xff]
    %v2101 = vld [vmem:[%s3 + $0x38] sm:$0xff]
    %v2102 = vld [vmem:[%s3 + $0x40] sm:$0xff]
    %v2103 = vld [vmem:[%s3 + $0x48] sm:$0xff]
    %v2104 = vld [vmem:[%s3 + $0x50] sm:$0xff]
    %v2105 = vld [vmem:[%s3 + $0x58] sm:$0xff]
    %v2106 = vld [vmem:[%s3 + $0x60] sm:$0xff]
    %v2107 = vld [vmem:[%s3 + $0x68] sm:$0xff]
    %v2108 = vld [vmem:[%s3 + $0x70] sm:$0xff]
    %v2109 = vld [vmem:[%s3 + $0x78] sm:$0xff]
    %v2110 = vld [vmem:[%s4 + $0x5] sm:$0x1]
    %v2111 = vlaneseq
    %v2112 = vshrl.u32 %v2111, 7
    %v2113 = vsub.s32 0, %v2112
    %v2114 = vrot.slane %v2110, %v2113
    %2115 = vmatprep.subr.mxu0 0.0
    %2116 = vmatpush1.msra.mxu0 %v2094
    %2117 = vmatprep.subr.mxu0 0.0
    %2118 = vmatpush1.msra.mxu0 %v2095
    %2119 = vmatprep.subr.mxu0 0.0
    %2120 = vmatpush1.msra.mxu0 %v2096
    %2121 = vmatprep.subr.mxu0 0.0
    %2122 = vmatpush1.msra.mxu0 %v2097
    %2123 = vmatprep.subr.mxu0 0.0
    %2124 = vmatpush1.msra.mxu0 %v2098
    %2125 = vmatprep.subr.mxu0 0.0
    %2126 = vmatpush1.msra.mxu0 %v2099
    %2127 = vmatprep.subr.mxu0 0.0
    %2128 = vmatpush1.msra.mxu0 %v2100
    %2129 = vmatprep.subr.mxu0 0.0
    %2130 = vmatpush1.msra.mxu0 %v2101
    %2131 = vmatprep.subr.mxu0 0.0
    %2132 = vmatpush1.msra.mxu0 %v2102
    %2133 = vmatprep.subr.mxu0 0.0
    %2134 = vmatpush1.msra.mxu0 %v2103
    %2135 = vmatprep.subr.mxu0 0.0
    %2136 = vmatpush1.msra.mxu0 %v2104
    %2137 = vmatprep.subr.mxu0 0.0
    %2138 = vmatpush1.msra.mxu0 %v2105
    %2139 = vmatprep.subr.mxu0 0.0
    %2140 = vmatpush1.msra.mxu0 %v2106
    %2141 = vmatprep.subr.mxu0 0.0
    %2142 = vmatpush1.msra.mxu0 %v2107
    %2143 = vmatprep.subr.mxu0 0.0
    %2144 = vmatpush1.msra.mxu0 %v2108
    %2145 = vmatprep.subr.mxu0 0.0
    %2146 = vmatpush1.msra.mxu0 %v2109
    %2147 = vmatprep.subr.mxu0 0.0
    %2148 = vmatpush1.msra.mxu0 0.0
    %2149 = vmatprep.subr.mxu0 0.0
    %2150 = vmatpush1.msra.mxu0 0.0
    %2151 = vmatprep.subr.mxu0 0.0
    %2152 = vmatpush1.msra.mxu0 0.0
    %2153 = vmatprep.subr.mxu0 0.0
    %2154 = vmatpush1.msra.mxu0 0.0
    %2155 = vmatprep.subr.mxu0 0.0
    %2156 = vmatpush1.msra.mxu0 0.0
    %2157 = vmatprep.subr.mxu0 0.0
    %2158 = vmatpush1.msra.mxu0 0.0
    %2159 = vmatprep.subr.mxu0 0.0
    %2160 = vmatpush1.msra.mxu0 0.0
    %2161 = vmatprep.subr.mxu0 0.0
    %2162 = vmatpush1.msra.mxu0 0.0
    %2163 = vmatprep.subr.mxu0 0.0
    %2164 = vmatpush1.msra.mxu0 0.0
    %2165 = vmatprep.subr.mxu0 0.0
    %2166 = vmatpush1.msra.mxu0 0.0
    %2167 = vmatprep.subr.mxu0 0.0
    %2168 = vmatpush1.msra.mxu0 0.0
    %2169 = vmatprep.subr.mxu0 0.0
    %2170 = vmatpush1.msra.mxu0 0.0
    %2171 = vmatprep.subr.mxu0 0.0
    %2172 = vmatpush1.msra.mxu0 0.0
    %2173 = vmatprep.subr.mxu0 0.0
    %2174 = vmatpush1.msra.mxu0 0.0
    %2175 = vmatprep.subr.mxu0 0.0
    %2176 = vmatpush1.msra.mxu0 0.0
    %2177 = vmatprep.subr.mxu0 0.0
    %2178 = vmatpush1.msra.mxu0 0.0
    %2179 = vmatprep.mubr.f32.mxu0 0.0
    %2180 = vmatmul.mubr.f32.gmra.mrb[0].mxu0 %v2092
    %v2181 = vpop.f32.mrb[0].mxu0
    %v2182 = vadd.f32 %v2114, %v2181
    %v2183 = vpop.f32.mrb[0].mxu0
    %2184 = vmatprep.mubr.f32.mxu0 0.0
    %2185 = vmatmul.mubr.f32.gmra.mrb[0].mxu0 %v2093
    %v2186 = vpop.f32.mrb[0].mxu0
    %v2187 = vadd.f32 %v2114, %v2186
    %v2188 = vpop.f32.mrb[0].mxu0
    %2189 = vdwg.mxu0
    %v2190 = vadd.f32 %v2182, %v1998
    %v2191 = vadd.f32 %v2187, %v1999
    %v2192 = vld [vmem:[%s4 + $0x3] sm:$0x1]
    %v2193 = vld [vmem:[%s4 + $0x4] sm:$0x1]
    %v2194 = vsel %vm72, %v2190, 0.0
    %2195 = vadd.xlane.f32.xlu0 %v2194
    %v2196 = vpop.xlane.xlu0 %2195
    %v2197 = vsel %vm72, %v2191, 0.0
    %2198 = vadd.xlane.f32.xlu0 %v2197
    %v2199 = vpop.xlane.xlu0 %2198
    %v2200 = vmul.f32 %v2196, %v1967
    %v2201 = vmul.f32 %v2199, %v1967
    %v2202 = vsub.f32 %v2190, %v2200
    %v2203 = vsub.f32 %v2191, %v2201
    %v2204 = vmul.f32 %v2202, %v2202
    %v2205 = vmul.f32 %v2203, %v2203
    %v2206 = vsel %vm72, %v2204, 0.0
    %2207 = vadd.xlane.f32.xlu0 %v2206
    %v2208 = vpop.xlane.xlu0 %2207
    %v2209 = vsel %vm72, %v2205, 0.0
    %2210 = vadd.xlane.f32.xlu0 %v2209
    %v2211 = vpop.xlane.xlu0 %2210
    %v2212 = vmul.f32 %v2208, %v1967
    %v2213 = vmul.f32 %v2211, %v1967
    %v2214 = vadd.f32 %v2212, 1e-05
    %v2215 = vadd.f32 %v2213, 1e-05
    %v2216 = vrsqrt.pop %v2214
    %v2217 = vrsqrt.pop %v2215
    %v2218 = vmul.f32 %v2202, %v2216
    %v2219 = vmul.f32 %v2203, %v2217
    %v2220 = vlaneseq
    %v2221 = vshrl.u32 %v2220, 7
    %v2222 = vsub.s32 0, %v2221
    %v2223 = vrot.slane %v2192, %v2222
    %v2224 = vmul.f32 %v2218, %v2223
    %v2225 = vmul.f32 %v2219, %v2223
    %v2226 = vlaneseq
    %v2227 = vshrl.u32 %v2226, 7
    %v2228 = vsub.s32 0, %v2227
    %v2229 = vrot.slane %v2193, %v2228
    %v2230 = vadd.f32 %v2224, %v2229
    %v2231 = vadd.f32 %v2225, %v2229
    %2232 = vst.msk [vmem:[#allocation5] sm:$0xff] %vm72, %v2230
    %2233 = vst.msk [vmem:[#allocation5 + $0x8] sm:$0xff] %vm72, %v2231
    // Predicated region
    $region30: #{tpu_custom_call.1} parent=1 // pred_check
      _
    $region31: #{tpu_custom_call.1} parent=1 // pred_check_branch
      %2235 = sbr.rel (0) target = $region33
    $region32: #{tpu_custom_call.1} parent=1 // pred_region
      %s2237 = ssub.s32 256, 256
      %2238 = vsyncadd [#allocation4], %s2237
      %s2239 = sshll.u32 [#allocation5], 4
      %s2240 = int_to_ptr.vmem [resolvable:$true] %s2239
      %2245 = dma.vmem_to_hbm [thread:$0]  %s2240, 256, %s6, [#allocation4], 128, 128, 8
    $region33: #{tpu_custom_call.1} parent=1 // pred_fallthru
      _
    // Predicated region
    $region34: #{tpu_custom_call.1} parent=1 // pred_check
      _
    $region35: #{tpu_custom_call.1} parent=1 // pred_check_branch
      %2247 = sbr.rel (0) target = $region37
    $region36: #{tpu_custom_call.1} parent=1 // pred_region
      %2248 = dma.done [#allocation4], 256
    $region37: #{tpu_custom_call.1} parent=1 // pred_fallthru
      _
    %2249 = vsyncpa [#allocation3], 1
    %2250 = vsyncpa [#allocation4], 1

</llo_original>
